<compile_context>
chip_gen: v7x
topology: tpu7x:2x2x1
jax: 0.10.0
libtpu: 0.0.40
codegen_flags: <defaults>
</compile_context>

<pallas_src>
from functools import partial

import jax
import jax.numpy as jnp
from jax.experimental import pallas as pl
from jax.experimental.pallas import tpu as pltpu
import numpy as np


def clf_kernel(x_ref, w_ref, b_ref, out_ref):
    B, T = x_ref.shape
    G = w_ref.shape[1]                # 4*H
    H = G // 4
    C = out_ref.shape[1]

    x = x_ref[...]                    # (B, T)

    # static slices of the packed weight slab (zero-cost views)
    whh1 = w_ref[0 * H:1 * H, :]      # (H, 4H)
    wih2 = w_ref[1 * H:2 * H, :]      # (H, 4H)
    whh2 = w_ref[2 * H:3 * H, :]      # (H, 4H)
    wlin = w_ref[3 * H:4 * H, :]      # (H, 4H), columns >= C are zero

    # row slab: [W_ih1^T ; b_ih1+b_hh1 ; b_ih2+b_hh2 ; blin_pad]
    # hoisted broadcasts (done once, not per iteration)
    wih1_b = jnp.broadcast_to(b_ref[0:1, :], (B, G))
    b1_b = jnp.broadcast_to(b_ref[1:2, :], (B, G))
    b2_b = jnp.broadcast_to(b_ref[2:3, :], (B, G))
    blin_b = jnp.broadcast_to(b_ref[3:4, :], (B, G))

    def cell(gates, c):
        # PyTorch gate order (i, f, g, o): one full-width sigmoid + one
        # quarter-width tanh — minimal EUP work for a single-vreg gate vector.
        act = jax.nn.sigmoid(gates)
        i = act[:, 0 * H:1 * H]
        f = act[:, 1 * H:2 * H]
        o = act[:, 3 * H:4 * H]
        g = jnp.tanh(gates[:, 2 * H:3 * H])
        c_new = f * c + i * g
        return o * jnp.tanh(c_new), c_new

    zeros = jnp.zeros((B, H), jnp.float32)
    h1, c1, h2, c2 = zeros, zeros, zeros, zeros

    # T is a static Python int -> fully unrolled recurrence (LLO sees all steps)
    for t in range(T):
        # layer 1: rank-1 input projection (depends only on x -> hoistable by
        # the scheduler, off the serial critical path) + hidden matmul
        gx1 = x[:, t:t + 1] * wih1_b + b1_b
        gates1 = gx1 + jnp.dot(h1, whh1, preferred_element_type=jnp.float32)
        h1, c1 = cell(gates1, c1)

        # layer 2: un-fused dots.  h2 @ W_hh2 only depends on the previous
        # step's h2, so its MXU push issues before h1(t) is ready.
        gates2 = (jnp.dot(h2, whh2, preferred_element_type=jnp.float32)
                  + jnp.dot(h1, wih2, preferred_element_type=jnp.float32)
                  + b2_b)
        h2, c2 = cell(gates2, c2)

    logits = jnp.dot(h2, wlin, preferred_element_type=jnp.float32) + blin_b
    out_ref[...] = logits[:, :C]      # static lane slice -> (B, C) store


@partial(jax.jit, static_argnames=("n_classes",))
def clf_forward(x, wslab, bslab, *, n_classes):
    """Jitted forward: contains ONLY the pallas_call (no wrapper-side ops)."""
    B = x.shape[0]
    vmem = pl.BlockSpec(memory_space=pltpu.MemorySpace.VMEM)
    return pl.pallas_call(
        clf_kernel,
        out_shape=jax.ShapeDtypeStruct((B, n_classes), jnp.float32),
        in_specs=[vmem, vmem, vmem],
        out_specs=vmem,
    )(x, wslab, bslab)


def pack_params(p):
    """One-time (eager) packing of parameters into two kernel operands."""
    H = p["whh1"].shape[0]
    G = 4 * H
    C = p["wlin"].shape[1]
    assert G % 128 == 0, "4*hidden_size must be a multiple of 128 (lane-aligned gates)"
    assert C <= G, "n_classes must fit in the 4H lane width"
    wlin_pad = jnp.pad(p["wlin"], ((0, 0), (0, G - C)))
    blin_pad = jnp.pad(p["blin"], ((0, 0), (0, G - C)))
    wslab = jnp.concatenate([p["whh1"], p["wih2"], p["whh2"], wlin_pad], axis=0)  # (4H, 4H)
    bslab = jnp.concatenate([p["wih1"], p["b1"], p["b2"], blin_pad], axis=0)      # (4, 4H)
    return wslab.astype(jnp.float32), bslab.astype(jnp.float32)


def init_params(key, hidden_size, n_classes):
    H, C = hidden_size, n_classes
    k = 1.0 / np.sqrt(H)
    keys = jax.random.split(key, 9)
    u = lambda kk, shape: jax.random.uniform(kk, shape, jnp.float32, -k, k)
    return {
        # lstm1: input_size = 1 (weights stored pre-transposed)
        "wih1": u(keys[0], (1, 4 * H)),                              # W_ih^T
        "whh1": u(keys[1], (H, 4 * H)),                              # W_hh^T
        "b1":   u(keys[2], (1, 4 * H)) + u(keys[3], (1, 4 * H)),     # b_ih + b_hh
        # lstm2: input_size = H
        "wih2": u(keys[4], (H, 4 * H)),
        "whh2": u(keys[5], (H, 4 * H)),
        "b2":   u(keys[6], (1, 4 * H)) + u(keys[7], (1, 4 * H)),
        # linear
        "wlin": u(keys[8], (H, C)),
        "blin": jnp.zeros((1, C), jnp.float32),
    }


def clf_reference(x, p):
    """Pure numpy reference (same math as nn.LSTMCell stack + Linear)."""
    x = np.asarray(x, np.float64)
    B, T = x.shape
    H = p["whh1"].shape[0]
    sig = lambda z: 1.0 / (1.0 + np.exp(-z))

    def cell(gx, h, c, whh, b):
        g = gx + h @ np.asarray(whh, np.float64) + np.asarray(b, np.float64)
        i, f, gg, o = (sig(g[:, :H]), sig(g[:, H:2 * H]),
                       np.tanh(g[:, 2 * H:3 * H]), sig(g[:, 3 * H:]))
        c = f * c + i * gg
        return o * np.tanh(c), c

    h1 = c1 = h2 = c2 = np.zeros((B, H))
    for t in range(T):
        gx1 = x[:, t:t + 1] * np.asarray(p["wih1"], np.float64)
        h1, c1 = cell(gx1, h1, c1, p["whh1"], p["b1"])
        gx2 = h1 @ np.asarray(p["wih2"], np.float64)
        h2, c2 = cell(gx2, h2, c2, p["whh2"], p["b2"])
    return h2 @ np.asarray(p["wlin"], np.float64) + np.asarray(p["blin"], np.float64)


if __name__ == "__main__":
    # small shapes consistent with the module: batch=2, seq=8, hidden=32, classes=4
    batch, seq_len, hidden, n_classes = 2, 8, 32, 4

    key = jax.random.PRNGKey(0)
    kx, kp = jax.random.split(key)
    x = jax.random.normal(kx, (batch, seq_len), jnp.float32)
    params = init_params(kp, hidden, n_classes)

    # one-time param packing, outside the jitted forward
    wslab, bslab = pack_params(params)

    out = clf_forward(x, wslab, bslab, n_classes=n_classes)
    out = jax.block_until_ready(out)

    ref = clf_reference(x, params)
    np.testing.assert_allclose(np.asarray(out), ref, rtol=1e-4, atol=1e-5)

    print("KERNEL_OK")
</pallas_src>

<mosaic_0001>
module attributes {stable_mosaic.version = 11 : i64} {
  func.func @clf_kernel(%arg0: memref<2x8xf32, #tpu.memory_space<vmem>>, %arg1: memref<128x128xf32, #tpu.memory_space<vmem>>, %arg2: memref<4x128xf32, #tpu.memory_space<vmem>>, %arg3: memref<2x4xf32, #tpu.memory_space<vmem>>) attributes {dimension_semantics = [], scalar_prefetch = 0 : i64, scratch_operands = 0 : i64, tpu.core_type = #tpu.core_type<tc>} {
    %c0 = arith.constant 0 : index
    %c0_0 = arith.constant 0 : index
    %0 = vector.load %arg0[%c0, %c0_0] : memref<2x8xf32, #tpu.memory_space<vmem>>, vector<2x8xf32>
    %c0_1 = arith.constant 0 : index
    %c0_2 = arith.constant 0 : index
    %1 = vector.load %arg1[%c0_1, %c0_2] : memref<128x128xf32, #tpu.memory_space<vmem>>, vector<32x128xf32>
    %c32 = arith.constant 32 : index
    %c0_3 = arith.constant 0 : index
    %2 = vector.load %arg1[%c32, %c0_3] : memref<128x128xf32, #tpu.memory_space<vmem>>, vector<32x128xf32>
    %c64 = arith.constant 64 : index
    %c0_4 = arith.constant 0 : index
    %3 = vector.load %arg1[%c64, %c0_4] : memref<128x128xf32, #tpu.memory_space<vmem>>, vector<32x128xf32>
    %c96 = arith.constant 96 : index
    %c0_5 = arith.constant 0 : index
    %4 = vector.load %arg1[%c96, %c0_5] : memref<128x128xf32, #tpu.memory_space<vmem>>, vector<32x128xf32>
    %c0_6 = arith.constant 0 : index
    %c0_7 = arith.constant 0 : index
    %5 = vector.load %arg2[%c0_6, %c0_7] : memref<4x128xf32, #tpu.memory_space<vmem>>, vector<1x128xf32>
    %6 = vector.shape_cast %5 : vector<1x128xf32> to vector<1x128xf32>
    %7 = vector.broadcast %6 : vector<1x128xf32> to vector<2x128xf32>
    %c1 = arith.constant 1 : index
    %c0_8 = arith.constant 0 : index
    %8 = vector.load %arg2[%c1, %c0_8] : memref<4x128xf32, #tpu.memory_space<vmem>>, vector<1x128xf32>
    %9 = vector.shape_cast %8 : vector<1x128xf32> to vector<1x128xf32>
    %10 = vector.broadcast %9 : vector<1x128xf32> to vector<2x128xf32>
    %c2 = arith.constant 2 : index
    %c0_9 = arith.constant 0 : index
    %11 = vector.load %arg2[%c2, %c0_9] : memref<4x128xf32, #tpu.memory_space<vmem>>, vector<1x128xf32>
    %12 = vector.shape_cast %11 : vector<1x128xf32> to vector<1x128xf32>
    %13 = vector.broadcast %12 : vector<1x128xf32> to vector<2x128xf32>
    %c3 = arith.constant 3 : index
    %c0_10 = arith.constant 0 : index
    %14 = vector.load %arg2[%c3, %c0_10] : memref<4x128xf32, #tpu.memory_space<vmem>>, vector<1x128xf32>
    %15 = vector.shape_cast %14 : vector<1x128xf32> to vector<1x128xf32>
    %16 = vector.broadcast %15 : vector<1x128xf32> to vector<2x128xf32>
    %cst = arith.constant 0.000000e+00 : f32
    %17 = vector.broadcast %cst : f32 to vector<2x32xf32>
    %18 = vector.extract_strided_slice %0 {offsets = [0, 0], sizes = [2, 1], strides = [1, 1]} : vector<2x8xf32> to vector<2x1xf32>
    %19 = vector.broadcast %18 : vector<2x1xf32> to vector<2x128xf32>
    %20 = arith.mulf %19, %7 : vector<2x128xf32>
    %21 = arith.addf %20, %10 : vector<2x128xf32>
    %cst_11 = arith.constant dense<0.000000e+00> : vector<2x128xf32>
    %22 = tpu.matmul %17, %1, %cst_11 {dimension_numbers = #tpu.dot_dimension_numbers<[1], [0], [0], [1], [0, 0, 1, 1], [], []>} : vector<2x32xf32>, vector<32x128xf32>, vector<2x128xf32> -> vector<2x128xf32>
    %23 = arith.addf %21, %22 : vector<2x128xf32>
    %24 = arith.negf %23 : vector<2x128xf32>
    %25 = math.exp %24 : vector<2x128xf32>
    %cst_12 = arith.constant 1.000000e+00 : f32
    %26 = vector.broadcast %cst_12 : f32 to vector<2x128xf32>
    %27 = arith.addf %26, %25 : vector<2x128xf32>
    %28 = arith.divf %26, %27 : vector<2x128xf32>
    %29 = vector.extract_strided_slice %28 {offsets = [0, 0], sizes = [2, 32], strides = [1, 1]} : vector<2x128xf32> to vector<2x32xf32>
    %30 = vector.extract_strided_slice %28 {offsets = [0, 32], sizes = [2, 32], strides = [1, 1]} : vector<2x128xf32> to vector<2x32xf32>
    %31 = vector.extract_strided_slice %28 {offsets = [0, 96], sizes = [2, 32], strides = [1, 1]} : vector<2x128xf32> to vector<2x32xf32>
    %32 = vector.extract_strided_slice %23 {offsets = [0, 64], sizes = [2, 32], strides = [1, 1]} : vector<2x128xf32> to vector<2x32xf32>
    %33 = math.tanh %32 : vector<2x32xf32>
    %34 = arith.mulf %30, %17 : vector<2x32xf32>
    %35 = arith.mulf %29, %33 : vector<2x32xf32>
    %36 = arith.addf %34, %35 : vector<2x32xf32>
    %37 = math.tanh %36 : vector<2x32xf32>
    %38 = arith.mulf %31, %37 : vector<2x32xf32>
    %cst_13 = arith.constant dense<0.000000e+00> : vector<2x128xf32>
    %39 = tpu.matmul %17, %3, %cst_13 {dimension_numbers = #tpu.dot_dimension_numbers<[1], [0], [0], [1], [0, 0, 1, 1], [], []>} : vector<2x32xf32>, vector<32x128xf32>, vector<2x128xf32> -> vector<2x128xf32>
    %cst_14 = arith.constant dense<0.000000e+00> : vector<2x128xf32>
    %40 = tpu.matmul %38, %2, %cst_14 {dimension_numbers = #tpu.dot_dimension_numbers<[1], [0], [0], [1], [0, 0, 1, 1], [], []>} : vector<2x32xf32>, vector<32x128xf32>, vector<2x128xf32> -> vector<2x128xf32>
    %41 = arith.addf %39, %40 : vector<2x128xf32>
    %42 = arith.addf %41, %13 : vector<2x128xf32>
    %43 = arith.negf %42 : vector<2x128xf32>
    %44 = math.exp %43 : vector<2x128xf32>
    %cst_15 = arith.constant 1.000000e+00 : f32
    %45 = vector.broadcast %cst_15 : f32 to vector<2x128xf32>
    %46 = arith.addf %45, %44 : vector<2x128xf32>
    %47 = arith.divf %45, %46 : vector<2x128xf32>
    %48 = vector.extract_strided_slice %47 {offsets = [0, 0], sizes = [2, 32], strides = [1, 1]} : vector<2x128xf32> to vector<2x32xf32>
    %49 = vector.extract_strided_slice %47 {offsets = [0, 32], sizes = [2, 32], strides = [1, 1]} : vector<2x128xf32> to vector<2x32xf32>
    %50 = vector.extract_strided_slice %47 {offsets = [0, 96], sizes = [2, 32], strides = [1, 1]} : vector<2x128xf32> to vector<2x32xf32>
    %51 = vector.extract_strided_slice %42 {offsets = [0, 64], sizes = [2, 32], strides = [1, 1]} : vector<2x128xf32> to vector<2x32xf32>
    %52 = math.tanh %51 : vector<2x32xf32>
    %53 = arith.mulf %49, %17 : vector<2x32xf32>
    %54 = arith.mulf %48, %52 : vector<2x32xf32>
    %55 = arith.addf %53, %54 : vector<2x32xf32>
    %56 = math.tanh %55 : vector<2x32xf32>
    %57 = arith.mulf %50, %56 : vector<2x32xf32>
    %58 = vector.extract_strided_slice %0 {offsets = [0, 1], sizes = [2, 1], strides = [1, 1]} : vector<2x8xf32> to vector<2x1xf32>
    %59 = vector.broadcast %58 : vector<2x1xf32> to vector<2x128xf32>
    %60 = arith.mulf %59, %7 : vector<2x128xf32>
    %61 = arith.addf %60, %10 : vector<2x128xf32>
    %cst_16 = arith.constant dense<0.000000e+00> : vector<2x128xf32>
    %62 = tpu.matmul %38, %1, %cst_16 {dimension_numbers = #tpu.dot_dimension_numbers<[1], [0], [0], [1], [0, 0, 1, 1], [], []>} : vector<2x32xf32>, vector<32x128xf32>, vector<2x128xf32> -> vector<2x128xf32>
    %63 = arith.addf %61, %62 : vector<2x128xf32>
    %64 = arith.negf %63 : vector<2x128xf32>
    %65 = math.exp %64 : vector<2x128xf32>
    %cst_17 = arith.constant 1.000000e+00 : f32
    %66 = vector.broadcast %cst_17 : f32 to vector<2x128xf32>
    %67 = arith.addf %66, %65 : vector<2x128xf32>
    %68 = arith.divf %66, %67 : vector<2x128xf32>
    %69 = vector.extract_strided_slice %68 {offsets = [0, 0], sizes = [2, 32], strides = [1, 1]} : vector<2x128xf32> to vector<2x32xf32>
    %70 = vector.extract_strided_slice %68 {offsets = [0, 32], sizes = [2, 32], strides = [1, 1]} : vector<2x128xf32> to vector<2x32xf32>
    %71 = vector.extract_strided_slice %68 {offsets = [0, 96], sizes = [2, 32], strides = [1, 1]} : vector<2x128xf32> to vector<2x32xf32>
    %72 = vector.extract_strided_slice %63 {offsets = [0, 64], sizes = [2, 32], strides = [1, 1]} : vector<2x128xf32> to vector<2x32xf32>
    %73 = math.tanh %72 : vector<2x32xf32>
    %74 = arith.mulf %70, %36 : vector<2x32xf32>
    %75 = arith.mulf %69, %73 : vector<2x32xf32>
    %76 = arith.addf %74, %75 : vector<2x32xf32>
    %77 = math.tanh %76 : vector<2x32xf32>
    %78 = arith.mulf %71, %77 : vector<2x32xf32>
    %cst_18 = arith.constant dense<0.000000e+00> : vector<2x128xf32>
    %79 = tpu.matmul %57, %3, %cst_18 {dimension_numbers = #tpu.dot_dimension_numbers<[1], [0], [0], [1], [0, 0, 1, 1], [], []>} : vector<2x32xf32>, vector<32x128xf32>, vector<2x128xf32> -> vector<2x128xf32>
    %cst_19 = arith.constant dense<0.000000e+00> : vector<2x128xf32>
    %80 = tpu.matmul %78, %2, %cst_19 {dimension_numbers = #tpu.dot_dimension_numbers<[1], [0], [0], [1], [0, 0, 1, 1], [], []>} : vector<2x32xf32>, vector<32x128xf32>, vector<2x128xf32> -> vector<2x128xf32>
    %81 = arith.addf %79, %80 : vector<2x128xf32>
    %82 = arith.addf %81, %13 : vector<2x128xf32>
    %83 = arith.negf %82 : vector<2x128xf32>
    %84 = math.exp %83 : vector<2x128xf32>
    %cst_20 = arith.constant 1.000000e+00 : f32
    %85 = vector.broadcast %cst_20 : f32 to vector<2x128xf32>
    %86 = arith.addf %85, %84 : vector<2x128xf32>
    %87 = arith.divf %85, %86 : vector<2x128xf32>
    %88 = vector.extract_strided_slice %87 {offsets = [0, 0], sizes = [2, 32], strides = [1, 1]} : vector<2x128xf32> to vector<2x32xf32>
    %89 = vector.extract_strided_slice %87 {offsets = [0, 32], sizes = [2, 32], strides = [1, 1]} : vector<2x128xf32> to vector<2x32xf32>
    %90 = vector.extract_strided_slice %87 {offsets = [0, 96], sizes = [2, 32], strides = [1, 1]} : vector<2x128xf32> to vector<2x32xf32>
    %91 = vector.extract_strided_slice %82 {offsets = [0, 64], sizes = [2, 32], strides = [1, 1]} : vector<2x128xf32> to vector<2x32xf32>
    %92 = math.tanh %91 : vector<2x32xf32>
    %93 = arith.mulf %89, %55 : vector<2x32xf32>
    %94 = arith.mulf %88, %92 : vector<2x32xf32>
    %95 = arith.addf %93, %94 : vector<2x32xf32>
    %96 = math.tanh %95 : vector<2x32xf32>
    %97 = arith.mulf %90, %96 : vector<2x32xf32>
    %98 = vector.extract_strided_slice %0 {offsets = [0, 2], sizes = [2, 1], strides = [1, 1]} : vector<2x8xf32> to vector<2x1xf32>
    %99 = vector.broadcast %98 : vector<2x1xf32> to vector<2x128xf32>
    %100 = arith.mulf %99, %7 : vector<2x128xf32>
    %101 = arith.addf %100, %10 : vector<2x128xf32>
    %cst_21 = arith.constant dense<0.000000e+00> : vector<2x128xf32>
    %102 = tpu.matmul %78, %1, %cst_21 {dimension_numbers = #tpu.dot_dimension_numbers<[1], [0], [0], [1], [0, 0, 1, 1], [], []>} : vector<2x32xf32>, vector<32x128xf32>, vector<2x128xf32> -> vector<2x128xf32>
    %103 = arith.addf %101, %102 : vector<2x128xf32>
    %104 = arith.negf %103 : vector<2x128xf32>
    %105 = math.exp %104 : vector<2x128xf32>
    %cst_22 = arith.constant 1.000000e+00 : f32
    %106 = vector.broadcast %cst_22 : f32 to vector<2x128xf32>
    %107 = arith.addf %106, %105 : vector<2x128xf32>
    %108 = arith.divf %106, %107 : vector<2x128xf32>
    %109 = vector.extract_strided_slice %108 {offsets = [0, 0], sizes = [2, 32], strides = [1, 1]} : vector<2x128xf32> to vector<2x32xf32>
    %110 = vector.extract_strided_slice %108 {offsets = [0, 32], sizes = [2, 32], strides = [1, 1]} : vector<2x128xf32> to vector<2x32xf32>
    %111 = vector.extract_strided_slice %108 {offsets = [0, 96], sizes = [2, 32], strides = [1, 1]} : vector<2x128xf32> to vector<2x32xf32>
    %112 = vector.extract_strided_slice %103 {offsets = [0, 64], sizes = [2, 32], strides = [1, 1]} : vector<2x128xf32> to vector<2x32xf32>
    %113 = math.tanh %112 : vector<2x32xf32>
    %114 = arith.mulf %110, %76 : vector<2x32xf32>
    %115 = arith.mulf %109, %113 : vector<2x32xf32>
    %116 = arith.addf %114, %115 : vector<2x32xf32>
    %117 = math.tanh %116 : vector<2x32xf32>
    %118 = arith.mulf %111, %117 : vector<2x32xf32>
    %cst_23 = arith.constant dense<0.000000e+00> : vector<2x128xf32>
    %119 = tpu.matmul %97, %3, %cst_23 {dimension_numbers = #tpu.dot_dimension_numbers<[1], [0], [0], [1], [0, 0, 1, 1], [], []>} : vector<2x32xf32>, vector<32x128xf32>, vector<2x128xf32> -> vector<2x128xf32>
    %cst_24 = arith.constant dense<0.000000e+00> : vector<2x128xf32>
    %120 = tpu.matmul %118, %2, %cst_24 {dimension_numbers = #tpu.dot_dimension_numbers<[1], [0], [0], [1], [0, 0, 1, 1], [], []>} : vector<2x32xf32>, vector<32x128xf32>, vector<2x128xf32> -> vector<2x128xf32>
    %121 = arith.addf %119, %120 : vector<2x128xf32>
    %122 = arith.addf %121, %13 : vector<2x128xf32>
    %123 = arith.negf %122 : vector<2x128xf32>
    %124 = math.exp %123 : vector<2x128xf32>
    %cst_25 = arith.constant 1.000000e+00 : f32
    %125 = vector.broadcast %cst_25 : f32 to vector<2x128xf32>
    %126 = arith.addf %125, %124 : vector<2x128xf32>
    %127 = arith.divf %125, %126 : vector<2x128xf32>
    %128 = vector.extract_strided_slice %127 {offsets = [0, 0], sizes = [2, 32], strides = [1, 1]} : vector<2x128xf32> to vector<2x32xf32>
    %129 = vector.extract_strided_slice %127 {offsets = [0, 32], sizes = [2, 32], strides = [1, 1]} : vector<2x128xf32> to vector<2x32xf32>
    %130 = vector.extract_strided_slice %127 {offsets = [0, 96], sizes = [2, 32], strides = [1, 1]} : vector<2x128xf32> to vector<2x32xf32>
    %131 = vector.extract_strided_slice %122 {offsets = [0, 64], sizes = [2, 32], strides = [1, 1]} : vector<2x128xf32> to vector<2x32xf32>
    %132 = math.tanh %131 : vector<2x32xf32>
    %133 = arith.mulf %129, %95 : vector<2x32xf32>
    %134 = arith.mulf %128, %132 : vector<2x32xf32>
    %135 = arith.addf %133, %134 : vector<2x32xf32>
    %136 = math.tanh %135 : vector<2x32xf32>
    %137 = arith.mulf %130, %136 : vector<2x32xf32>
    %138 = vector.extract_strided_slice %0 {offsets = [0, 3], sizes = [2, 1], strides = [1, 1]} : vector<2x8xf32> to vector<2x1xf32>
    %139 = vector.broadcast %138 : vector<2x1xf32> to vector<2x128xf32>
    %140 = arith.mulf %139, %7 : vector<2x128xf32>
    %141 = arith.addf %140, %10 : vector<2x128xf32>
    %cst_26 = arith.constant dense<0.000000e+00> : vector<2x128xf32>
    %142 = tpu.matmul %118, %1, %cst_26 {dimension_numbers = #tpu.dot_dimension_numbers<[1], [0], [0], [1], [0, 0, 1, 1], [], []>} : vector<2x32xf32>, vector<32x128xf32>, vector<2x128xf32> -> vector<2x128xf32>
    %143 = arith.addf %141, %142 : vector<2x128xf32>
    %144 = arith.negf %143 : vector<2x128xf32>
    %145 = math.exp %144 : vector<2x128xf32>
    %cst_27 = arith.constant 1.000000e+00 : f32
    %146 = vector.broadcast %cst_27 : f32 to vector<2x128xf32>
    %147 = arith.addf %146, %145 : vector<2x128xf32>
    %148 = arith.divf %146, %147 : vector<2x128xf32>
    %149 = vector.extract_strided_slice %148 {offsets = [0, 0], sizes = [2, 32], strides = [1, 1]} : vector<2x128xf32> to vector<2x32xf32>
    %150 = vector.extract_strided_slice %148 {offsets = [0, 32], sizes = [2, 32], strides = [1, 1]} : vector<2x128xf32> to vector<2x32xf32>
    %151 = vector.extract_strided_slice %148 {offsets = [0, 96], sizes = [2, 32], strides = [1, 1]} : vector<2x128xf32> to vector<2x32xf32>
    %152 = vector.extract_strided_slice %143 {offsets = [0, 64], sizes = [2, 32], strides = [1, 1]} : vector<2x128xf32> to vector<2x32xf32>
    %153 = math.tanh %152 : vector<2x32xf32>
    %154 = arith.mulf %150, %116 : vector<2x32xf32>
    %155 = arith.mulf %149, %153 : vector<2x32xf32>
    %156 = arith.addf %154, %155 : vector<2x32xf32>
    %157 = math.tanh %156 : vector<2x32xf32>
    %158 = arith.mulf %151, %157 : vector<2x32xf32>
    %cst_28 = arith.constant dense<0.000000e+00> : vector<2x128xf32>
    %159 = tpu.matmul %137, %3, %cst_28 {dimension_numbers = #tpu.dot_dimension_numbers<[1], [0], [0], [1], [0, 0, 1, 1], [], []>} : vector<2x32xf32>, vector<32x128xf32>, vector<2x128xf32> -> vector<2x128xf32>
    %cst_29 = arith.constant dense<0.000000e+00> : vector<2x128xf32>
    %160 = tpu.matmul %158, %2, %cst_29 {dimension_numbers = #tpu.dot_dimension_numbers<[1], [0], [0], [1], [0, 0, 1, 1], [], []>} : vector<2x32xf32>, vector<32x128xf32>, vector<2x128xf32> -> vector<2x128xf32>
    %161 = arith.addf %159, %160 : vector<2x128xf32>
    %162 = arith.addf %161, %13 : vector<2x128xf32>
    %163 = arith.negf %162 : vector<2x128xf32>
    %164 = math.exp %163 : vector<2x128xf32>
    %cst_30 = arith.constant 1.000000e+00 : f32
    %165 = vector.broadcast %cst_30 : f32 to vector<2x128xf32>
    %166 = arith.addf %165, %164 : vector<2x128xf32>
    %167 = arith.divf %165, %166 : vector<2x128xf32>
    %168 = vector.extract_strided_slice %167 {offsets = [0, 0], sizes = [2, 32], strides = [1, 1]} : vector<2x128xf32> to vector<2x32xf32>
    %169 = vector.extract_strided_slice %167 {offsets = [0, 32], sizes = [2, 32], strides = [1, 1]} : vector<2x128xf32> to vector<2x32xf32>
    %170 = vector.extract_strided_slice %167 {offsets = [0, 96], sizes = [2, 32], strides = [1, 1]} : vector<2x128xf32> to vector<2x32xf32>
    %171 = vector.extract_strided_slice %162 {offsets = [0, 64], sizes = [2, 32], strides = [1, 1]} : vector<2x128xf32> to vector<2x32xf32>
    %172 = math.tanh %171 : vector<2x32xf32>
    %173 = arith.mulf %169, %135 : vector<2x32xf32>
    %174 = arith.mulf %168, %172 : vector<2x32xf32>
    %175 = arith.addf %173, %174 : vector<2x32xf32>
    %176 = math.tanh %175 : vector<2x32xf32>
    %177 = arith.mulf %170, %176 : vector<2x32xf32>
    %178 = vector.extract_strided_slice %0 {offsets = [0, 4], sizes = [2, 1], strides = [1, 1]} : vector<2x8xf32> to vector<2x1xf32>
    %179 = vector.broadcast %178 : vector<2x1xf32> to vector<2x128xf32>
    %180 = arith.mulf %179, %7 : vector<2x128xf32>
    %181 = arith.addf %180, %10 : vector<2x128xf32>
    %cst_31 = arith.constant dense<0.000000e+00> : vector<2x128xf32>
    %182 = tpu.matmul %158, %1, %cst_31 {dimension_numbers = #tpu.dot_dimension_numbers<[1], [0], [0], [1], [0, 0, 1, 1], [], []>} : vector<2x32xf32>, vector<32x128xf32>, vector<2x128xf32> -> vector<2x128xf32>
    %183 = arith.addf %181, %182 : vector<2x128xf32>
    %184 = arith.negf %183 : vector<2x128xf32>
    %185 = math.exp %184 : vector<2x128xf32>
    %cst_32 = arith.constant 1.000000e+00 : f32
    %186 = vector.broadcast %cst_32 : f32 to vector<2x128xf32>
    %187 = arith.addf %186, %185 : vector<2x128xf32>
    %188 = arith.divf %186, %187 : vector<2x128xf32>
    %189 = vector.extract_strided_slice %188 {offsets = [0, 0], sizes = [2, 32], strides = [1, 1]} : vector<2x128xf32> to vector<2x32xf32>
    %190 = vector.extract_strided_slice %188 {offsets = [0, 32], sizes = [2, 32], strides = [1, 1]} : vector<2x128xf32> to vector<2x32xf32>
    %191 = vector.extract_strided_slice %188 {offsets = [0, 96], sizes = [2, 32], strides = [1, 1]} : vector<2x128xf32> to vector<2x32xf32>
    %192 = vector.extract_strided_slice %183 {offsets = [0, 64], sizes = [2, 32], strides = [1, 1]} : vector<2x128xf32> to vector<2x32xf32>
    %193 = math.tanh %192 : vector<2x32xf32>
    %194 = arith.mulf %190, %156 : vector<2x32xf32>
    %195 = arith.mulf %189, %193 : vector<2x32xf32>
    %196 = arith.addf %194, %195 : vector<2x32xf32>
    %197 = math.tanh %196 : vector<2x32xf32>
    %198 = arith.mulf %191, %197 : vector<2x32xf32>
    %cst_33 = arith.constant dense<0.000000e+00> : vector<2x128xf32>
    %199 = tpu.matmul %177, %3, %cst_33 {dimension_numbers = #tpu.dot_dimension_numbers<[1], [0], [0], [1], [0, 0, 1, 1], [], []>} : vector<2x32xf32>, vector<32x128xf32>, vector<2x128xf32> -> vector<2x128xf32>
    %cst_34 = arith.constant dense<0.000000e+00> : vector<2x128xf32>
    %200 = tpu.matmul %198, %2, %cst_34 {dimension_numbers = #tpu.dot_dimension_numbers<[1], [0], [0], [1], [0, 0, 1, 1], [], []>} : vector<2x32xf32>, vector<32x128xf32>, vector<2x128xf32> -> vector<2x128xf32>
    %201 = arith.addf %199, %200 : vector<2x128xf32>
    %202 = arith.addf %201, %13 : vector<2x128xf32>
    %203 = arith.negf %202 : vector<2x128xf32>
    %204 = math.exp %203 : vector<2x128xf32>
    %cst_35 = arith.constant 1.000000e+00 : f32
    %205 = vector.broadcast %cst_35 : f32 to vector<2x128xf32>
    %206 = arith.addf %205, %204 : vector<2x128xf32>
    %207 = arith.divf %205, %206 : vector<2x128xf32>
    %208 = vector.extract_strided_slice %207 {offsets = [0, 0], sizes = [2, 32], strides = [1, 1]} : vector<2x128xf32> to vector<2x32xf32>
    %209 = vector.extract_strided_slice %207 {offsets = [0, 32], sizes = [2, 32], strides = [1, 1]} : vector<2x128xf32> to vector<2x32xf32>
    %210 = vector.extract_strided_slice %207 {offsets = [0, 96], sizes = [2, 32], strides = [1, 1]} : vector<2x128xf32> to vector<2x32xf32>
    %211 = vector.extract_strided_slice %202 {offsets = [0, 64], sizes = [2, 32], strides = [1, 1]} : vector<2x128xf32> to vector<2x32xf32>
    %212 = math.tanh %211 : vector<2x32xf32>
    %213 = arith.mulf %209, %175 : vector<2x32xf32>
    %214 = arith.mulf %208, %212 : vector<2x32xf32>
    %215 = arith.addf %213, %214 : vector<2x32xf32>
    %216 = math.tanh %215 : vector<2x32xf32>
    %217 = arith.mulf %210, %216 : vector<2x32xf32>
    %218 = vector.extract_strided_slice %0 {offsets = [0, 5], sizes = [2, 1], strides = [1, 1]} : vector<2x8xf32> to vector<2x1xf32>
    %219 = vector.broadcast %218 : vector<2x1xf32> to vector<2x128xf32>
    %220 = arith.mulf %219, %7 : vector<2x128xf32>
    %221 = arith.addf %220, %10 : vector<2x128xf32>
    %cst_36 = arith.constant dense<0.000000e+00> : vector<2x128xf32>
    %222 = tpu.matmul %198, %1, %cst_36 {dimension_numbers = #tpu.dot_dimension_numbers<[1], [0], [0], [1], [0, 0, 1, 1], [], []>} : vector<2x32xf32>, vector<32x128xf32>, vector<2x128xf32> -> vector<2x128xf32>
    %223 = arith.addf %221, %222 : vector<2x128xf32>
    %224 = arith.negf %223 : vector<2x128xf32>
    %225 = math.exp %224 : vector<2x128xf32>
    %cst_37 = arith.constant 1.000000e+00 : f32
    %226 = vector.broadcast %cst_37 : f32 to vector<2x128xf32>
    %227 = arith.addf %226, %225 : vector<2x128xf32>
    %228 = arith.divf %226, %227 : vector<2x128xf32>
    %229 = vector.extract_strided_slice %228 {offsets = [0, 0], sizes = [2, 32], strides = [1, 1]} : vector<2x128xf32> to vector<2x32xf32>
    %230 = vector.extract_strided_slice %228 {offsets = [0, 32], sizes = [2, 32], strides = [1, 1]} : vector<2x128xf32> to vector<2x32xf32>
    %231 = vector.extract_strided_slice %228 {offsets = [0, 96], sizes = [2, 32], strides = [1, 1]} : vector<2x128xf32> to vector<2x32xf32>
    %232 = vector.extract_strided_slice %223 {offsets = [0, 64], sizes = [2, 32], strides = [1, 1]} : vector<2x128xf32> to vector<2x32xf32>
    %233 = math.tanh %232 : vector<2x32xf32>
    %234 = arith.mulf %230, %196 : vector<2x32xf32>
    %235 = arith.mulf %229, %233 : vector<2x32xf32>
    %236 = arith.addf %234, %235 : vector<2x32xf32>
    %237 = math.tanh %236 : vector<2x32xf32>
    %238 = arith.mulf %231, %237 : vector<2x32xf32>
    %cst_38 = arith.constant dense<0.000000e+00> : vector<2x128xf32>
    %239 = tpu.matmul %217, %3, %cst_38 {dimension_numbers = #tpu.dot_dimension_numbers<[1], [0], [0], [1], [0, 0, 1, 1], [], []>} : vector<2x32xf32>, vector<32x128xf32>, vector<2x128xf32> -> vector<2x128xf32>
    %cst_39 = arith.constant dense<0.000000e+00> : vector<2x128xf32>
    %240 = tpu.matmul %238, %2, %cst_39 {dimension_numbers = #tpu.dot_dimension_numbers<[1], [0], [0], [1], [0, 0, 1, 1], [], []>} : vector<2x32xf32>, vector<32x128xf32>, vector<2x128xf32> -> vector<2x128xf32>
    %241 = arith.addf %239, %240 : vector<2x128xf32>
    %242 = arith.addf %241, %13 : vector<2x128xf32>
    %243 = arith.negf %242 : vector<2x128xf32>
    %244 = math.exp %243 : vector<2x128xf32>
    %cst_40 = arith.constant 1.000000e+00 : f32
    %245 = vector.broadcast %cst_40 : f32 to vector<2x128xf32>
    %246 = arith.addf %245, %244 : vector<2x128xf32>
    %247 = arith.divf %245, %246 : vector<2x128xf32>
    %248 = vector.extract_strided_slice %247 {offsets = [0, 0], sizes = [2, 32], strides = [1, 1]} : vector<2x128xf32> to vector<2x32xf32>
    %249 = vector.extract_strided_slice %247 {offsets = [0, 32], sizes = [2, 32], strides = [1, 1]} : vector<2x128xf32> to vector<2x32xf32>
    %250 = vector.extract_strided_slice %247 {offsets = [0, 96], sizes = [2, 32], strides = [1, 1]} : vector<2x128xf32> to vector<2x32xf32>
    %251 = vector.extract_strided_slice %242 {offsets = [0, 64], sizes = [2, 32], strides = [1, 1]} : vector<2x128xf32> to vector<2x32xf32>
    %252 = math.tanh %251 : vector<2x32xf32>
    %253 = arith.mulf %249, %215 : vector<2x32xf32>
    %254 = arith.mulf %248, %252 : vector<2x32xf32>
    %255 = arith.addf %253, %254 : vector<2x32xf32>
    %256 = math.tanh %255 : vector<2x32xf32>
    %257 = arith.mulf %250, %256 : vector<2x32xf32>
    %258 = vector.extract_strided_slice %0 {offsets = [0, 6], sizes = [2, 1], strides = [1, 1]} : vector<2x8xf32> to vector<2x1xf32>
    %259 = vector.broadcast %258 : vector<2x1xf32> to vector<2x128xf32>
    %260 = arith.mulf %259, %7 : vector<2x128xf32>
    %261 = arith.addf %260, %10 : vector<2x128xf32>
    %cst_41 = arith.constant dense<0.000000e+00> : vector<2x128xf32>
    %262 = tpu.matmul %238, %1, %cst_41 {dimension_numbers = #tpu.dot_dimension_numbers<[1], [0], [0], [1], [0, 0, 1, 1], [], []>} : vector<2x32xf32>, vector<32x128xf32>, vector<2x128xf32> -> vector<2x128xf32>
    %263 = arith.addf %261, %262 : vector<2x128xf32>
    %264 = arith.negf %263 : vector<2x128xf32>
    %265 = math.exp %264 : vector<2x128xf32>
    %cst_42 = arith.constant 1.000000e+00 : f32
    %266 = vector.broadcast %cst_42 : f32 to vector<2x128xf32>
    %267 = arith.addf %266, %265 : vector<2x128xf32>
    %268 = arith.divf %266, %267 : vector<2x128xf32>
    %269 = vector.extract_strided_slice %268 {offsets = [0, 0], sizes = [2, 32], strides = [1, 1]} : vector<2x128xf32> to vector<2x32xf32>
    %270 = vector.extract_strided_slice %268 {offsets = [0, 32], sizes = [2, 32], strides = [1, 1]} : vector<2x128xf32> to vector<2x32xf32>
    %271 = vector.extract_strided_slice %268 {offsets = [0, 96], sizes = [2, 32], strides = [1, 1]} : vector<2x128xf32> to vector<2x32xf32>
    %272 = vector.extract_strided_slice %263 {offsets = [0, 64], sizes = [2, 32], strides = [1, 1]} : vector<2x128xf32> to vector<2x32xf32>
    %273 = math.tanh %272 : vector<2x32xf32>
    %274 = arith.mulf %270, %236 : vector<2x32xf32>
    %275 = arith.mulf %269, %273 : vector<2x32xf32>
    %276 = arith.addf %274, %275 : vector<2x32xf32>
    %277 = math.tanh %276 : vector<2x32xf32>
    %278 = arith.mulf %271, %277 : vector<2x32xf32>
    %cst_43 = arith.constant dense<0.000000e+00> : vector<2x128xf32>
    %279 = tpu.matmul %257, %3, %cst_43 {dimension_numbers = #tpu.dot_dimension_numbers<[1], [0], [0], [1], [0, 0, 1, 1], [], []>} : vector<2x32xf32>, vector<32x128xf32>, vector<2x128xf32> -> vector<2x128xf32>
    %cst_44 = arith.constant dense<0.000000e+00> : vector<2x128xf32>
    %280 = tpu.matmul %278, %2, %cst_44 {dimension_numbers = #tpu.dot_dimension_numbers<[1], [0], [0], [1], [0, 0, 1, 1], [], []>} : vector<2x32xf32>, vector<32x128xf32>, vector<2x128xf32> -> vector<2x128xf32>
    %281 = arith.addf %279, %280 : vector<2x128xf32>
    %282 = arith.addf %281, %13 : vector<2x128xf32>
    %283 = arith.negf %282 : vector<2x128xf32>
    %284 = math.exp %283 : vector<2x128xf32>
    %cst_45 = arith.constant 1.000000e+00 : f32
    %285 = vector.broadcast %cst_45 : f32 to vector<2x128xf32>
    %286 = arith.addf %285, %284 : vector<2x128xf32>
    %287 = arith.divf %285, %286 : vector<2x128xf32>
    %288 = vector.extract_strided_slice %287 {offsets = [0, 0], sizes = [2, 32], strides = [1, 1]} : vector<2x128xf32> to vector<2x32xf32>
    %289 = vector.extract_strided_slice %287 {offsets = [0, 32], sizes = [2, 32], strides = [1, 1]} : vector<2x128xf32> to vector<2x32xf32>
    %290 = vector.extract_strided_slice %287 {offsets = [0, 96], sizes = [2, 32], strides = [1, 1]} : vector<2x128xf32> to vector<2x32xf32>
    %291 = vector.extract_strided_slice %282 {offsets = [0, 64], sizes = [2, 32], strides = [1, 1]} : vector<2x128xf32> to vector<2x32xf32>
    %292 = math.tanh %291 : vector<2x32xf32>
    %293 = arith.mulf %289, %255 : vector<2x32xf32>
    %294 = arith.mulf %288, %292 : vector<2x32xf32>
    %295 = arith.addf %293, %294 : vector<2x32xf32>
    %296 = math.tanh %295 : vector<2x32xf32>
    %297 = arith.mulf %290, %296 : vector<2x32xf32>
    %298 = vector.extract_strided_slice %0 {offsets = [0, 7], sizes = [2, 1], strides = [1, 1]} : vector<2x8xf32> to vector<2x1xf32>
    %299 = vector.broadcast %298 : vector<2x1xf32> to vector<2x128xf32>
    %300 = arith.mulf %299, %7 : vector<2x128xf32>
    %301 = arith.addf %300, %10 : vector<2x128xf32>
    %cst_46 = arith.constant dense<0.000000e+00> : vector<2x128xf32>
    %302 = tpu.matmul %278, %1, %cst_46 {dimension_numbers = #tpu.dot_dimension_numbers<[1], [0], [0], [1], [0, 0, 1, 1], [], []>} : vector<2x32xf32>, vector<32x128xf32>, vector<2x128xf32> -> vector<2x128xf32>
    %303 = arith.addf %301, %302 : vector<2x128xf32>
    %304 = arith.negf %303 : vector<2x128xf32>
    %305 = math.exp %304 : vector<2x128xf32>
    %cst_47 = arith.constant 1.000000e+00 : f32
    %306 = vector.broadcast %cst_47 : f32 to vector<2x128xf32>
    %307 = arith.addf %306, %305 : vector<2x128xf32>
    %308 = arith.divf %306, %307 : vector<2x128xf32>
    %309 = vector.extract_strided_slice %308 {offsets = [0, 0], sizes = [2, 32], strides = [1, 1]} : vector<2x128xf32> to vector<2x32xf32>
    %310 = vector.extract_strided_slice %308 {offsets = [0, 32], sizes = [2, 32], strides = [1, 1]} : vector<2x128xf32> to vector<2x32xf32>
    %311 = vector.extract_strided_slice %308 {offsets = [0, 96], sizes = [2, 32], strides = [1, 1]} : vector<2x128xf32> to vector<2x32xf32>
    %312 = vector.extract_strided_slice %303 {offsets = [0, 64], sizes = [2, 32], strides = [1, 1]} : vector<2x128xf32> to vector<2x32xf32>
    %313 = math.tanh %312 : vector<2x32xf32>
    %314 = arith.mulf %310, %276 : vector<2x32xf32>
    %315 = arith.mulf %309, %313 : vector<2x32xf32>
    %316 = arith.addf %314, %315 : vector<2x32xf32>
    %317 = math.tanh %316 : vector<2x32xf32>
    %318 = arith.mulf %311, %317 : vector<2x32xf32>
    %cst_48 = arith.constant dense<0.000000e+00> : vector<2x128xf32>
    %319 = tpu.matmul %297, %3, %cst_48 {dimension_numbers = #tpu.dot_dimension_numbers<[1], [0], [0], [1], [0, 0, 1, 1], [], []>} : vector<2x32xf32>, vector<32x128xf32>, vector<2x128xf32> -> vector<2x128xf32>
    %cst_49 = arith.constant dense<0.000000e+00> : vector<2x128xf32>
    %320 = tpu.matmul %318, %2, %cst_49 {dimension_numbers = #tpu.dot_dimension_numbers<[1], [0], [0], [1], [0, 0, 1, 1], [], []>} : vector<2x32xf32>, vector<32x128xf32>, vector<2x128xf32> -> vector<2x128xf32>
    %321 = arith.addf %319, %320 : vector<2x128xf32>
    %322 = arith.addf %321, %13 : vector<2x128xf32>
    %323 = arith.negf %322 : vector<2x128xf32>
    %324 = math.exp %323 : vector<2x128xf32>
    %cst_50 = arith.constant 1.000000e+00 : f32
    %325 = vector.broadcast %cst_50 : f32 to vector<2x128xf32>
    %326 = arith.addf %325, %324 : vector<2x128xf32>
    %327 = arith.divf %325, %326 : vector<2x128xf32>
    %328 = vector.extract_strided_slice %327 {offsets = [0, 0], sizes = [2, 32], strides = [1, 1]} : vector<2x128xf32> to vector<2x32xf32>
    %329 = vector.extract_strided_slice %327 {offsets = [0, 32], sizes = [2, 32], strides = [1, 1]} : vector<2x128xf32> to vector<2x32xf32>
    %330 = vector.extract_strided_slice %327 {offsets = [0, 96], sizes = [2, 32], strides = [1, 1]} : vector<2x128xf32> to vector<2x32xf32>
    %331 = vector.extract_strided_slice %322 {offsets = [0, 64], sizes = [2, 32], strides = [1, 1]} : vector<2x128xf32> to vector<2x32xf32>
    %332 = math.tanh %331 : vector<2x32xf32>
    %333 = arith.mulf %329, %295 : vector<2x32xf32>
    %334 = arith.mulf %328, %332 : vector<2x32xf32>
    %335 = arith.addf %333, %334 : vector<2x32xf32>
    %336 = math.tanh %335 : vector<2x32xf32>
    %337 = arith.mulf %330, %336 : vector<2x32xf32>
    %cst_51 = arith.constant dense<0.000000e+00> : vector<2x128xf32>
    %338 = tpu.matmul %337, %4, %cst_51 {dimension_numbers = #tpu.dot_dimension_numbers<[1], [0], [0], [1], [0, 0, 1, 1], [], []>} : vector<2x32xf32>, vector<32x128xf32>, vector<2x128xf32> -> vector<2x128xf32>
    %339 = arith.addf %338, %16 : vector<2x128xf32>
    %340 = vector.extract_strided_slice %339 {offsets = [0, 0], sizes = [2, 4], strides = [1, 1]} : vector<2x128xf32> to vector<2x4xf32>
    %c0_52 = arith.constant 0 : index
    %c0_53 = arith.constant 0 : index
    %341 = vector.load %arg3[%c0_52, %c0_53] : memref<2x4xf32, #tpu.memory_space<vmem>>, vector<2x4xf32>
    tpu.vector_store %arg3[%c0_52, %c0_53], %340 {strides = array<i32>} : memref<2x4xf32, #tpu.memory_space<vmem>>, vector<2x4xf32>,
    return
  }
}

</mosaic_0001>

<llo_original>
// kernel: clf_forward.1
$region0: #{clf_forward.1}
  #allocation0 [shape = 'u32[]', space=smem, size = 0x4, offset = 0x4, fixed_abs, tag = 'smem constant byte address 0x4 - core index']
  #allocation1 [shape = 'u32[144,128]{1,0:T(1,128)}', space=vmem, size = 0x12000, scoped, tag = 'internal scratch']
  %s0 = inlined_call_operand.hbm [shape: f32[2,8], index: 0, kind: input, shape index: {}]
  %s1 = inlined_call_operand.hbm [shape: f32[128,128], index: 1, kind: input, shape index: {}]
  %s2 = inlined_call_operand.vmem [shape: f32[4,128], index: 2, kind: input, shape index: {}]
  %s3 = inlined_call_operand.hbm [shape: f32[2,4], index: 3, kind: output, shape index: {}]
  %s4 = sld [smem:[#allocation0]]
  $region30: #{clf_forward.1} parent=0
    _
  %s6 = ssub.s32 1, %s4
  %s7 = scalar_select 0, %s6, %s4
  $region1: #{clf_forward.1} parent=0
    #allocation2 [shape = 'u8[1024]{0}', space=vmem, size = 0x400, scoped, tag = 'input window, operand 0, single buffered']
    #allocation3 [shape = 's32[1]{0}', space=sflag, size = 0x4, scoped, tag = 'scoped memory for clf_forward.1']
    #allocation4 [shape = 's32[1]{0}', space=sflag, size = 0x4, scoped, tag = 'scoped memory for clf_forward.1']
    #allocation5 [shape = 'u8[65536]{0}', space=vmem, size = 0x10000, scoped, tag = 'input window, operand 1, single buffered']
    #allocation6 [shape = 's32[1]{0}', space=sflag, size = 0x4, scoped, tag = 'scoped memory for clf_forward.1']
    #allocation7 [shape = 'u8[1024]{0}', space=vmem, size = 0x400, scoped, tag = 'output window, operand 0, single buffered']
    %8 = vsyncpa [#allocation3], 0
    %9 = vsyncpa [#allocation6], 0
    %10 = vsyncpa [#allocation4], 0
    // Predicated region
    $region2: #{clf_forward.1} parent=1 // pred_check
      _
    $region3: #{clf_forward.1} parent=1 // pred_check_branch
      %12 = sbr.rel (0) target = $region5
    $region4: #{clf_forward.1} parent=1 // pred_region
      %s14 = ssub.s32 32, 32
      %15 = vsyncadd [#allocation3], %s14
      %s17 = sshll.u32 [#allocation2], 4
      %s18 = int_to_ptr.vmem [resolvable:$true] %s17
      %20 = dma.hbm_to_vmem [thread:$0]  %s0, 32, %s18, [#allocation3]
    $region5: #{clf_forward.1} parent=1 // pred_fallthru
      _
    // Predicated region
    $region6: #{clf_forward.1} parent=1 // pred_check
      _
    $region7: #{clf_forward.1} parent=1 // pred_check_branch
      %22 = sbr.rel (0) target = $region9
    $region8: #{clf_forward.1} parent=1 // pred_region
      %s24 = ssub.s32 2048, 2048
      %25 = vsyncadd [#allocation6], %s24
      %s26 = sshll.u32 [#allocation5], 4
      %s27 = int_to_ptr.vmem [resolvable:$true] %s26
      %32 = dma.hbm_to_vmem [thread:$0]  %s1, 2048, %s27, [#allocation6], 128, 128, 8
    $region9: #{clf_forward.1} parent=1 // pred_fallthru
      _
    // Predicated region
    $region10: #{clf_forward.1} parent=1 // pred_check
      _
    $region11: #{clf_forward.1} parent=1 // pred_check_branch
      %34 = sbr.rel (0) target = $region13
    $region12: #{clf_forward.1} parent=1 // pred_region
      _
    $region13: #{clf_forward.1} parent=1 // pred_fallthru
      _
    // Predicated region
    $region14: #{clf_forward.1} parent=1 // pred_check
      _
    $region15: #{clf_forward.1} parent=1 // pred_check_branch
      %36 = sbr.rel (0) target = $region17
    $region16: #{clf_forward.1} parent=1 // pred_region
      %37 = dma.done [#allocation3], 32
    $region17: #{clf_forward.1} parent=1 // pred_fallthru
      _
    // Predicated region
    $region18: #{clf_forward.1} parent=1 // pred_check
      _
    $region19: #{clf_forward.1} parent=1 // pred_check_branch
      %39 = sbr.rel (0) target = $region21
    $region20: #{clf_forward.1} parent=1 // pred_region
      %40 = dma.done [#allocation6], 2048
    $region21: #{clf_forward.1} parent=1 // pred_fallthru
      _
    %v41 = vld [vmem:[#allocation2] sm:$0x3]
    %v42 = vld [vmem:[#allocation5] sm:$0xff]
    %v43 = vld [vmem:[#allocation5 + $0x8] sm:$0xff]
    %v44 = vld [vmem:[#allocation5 + $0x10] sm:$0xff]
    %v45 = vld [vmem:[#allocation5 + $0x18] sm:$0xff]
    %v46 = vld [vmem:[#allocation5 + $0x20] sm:$0xff]
    %v47 = vld [vmem:[#allocation5 + $0x28] sm:$0xff]
    %v48 = vld [vmem:[#allocation5 + $0x30] sm:$0xff]
    %v49 = vld [vmem:[#allocation5 + $0x38] sm:$0xff]
    %v50 = vld [vmem:[#allocation5 + $0x40] sm:$0xff]
    %v51 = vld [vmem:[#allocation5 + $0x48] sm:$0xff]
    %v52 = vld [vmem:[#allocation5 + $0x50] sm:$0xff]
    %v53 = vld [vmem:[#allocation5 + $0x58] sm:$0xff]
    %v54 = vld [vmem:[#allocation5 + $0x60] sm:$0xff]
    %v55 = vld [vmem:[#allocation5 + $0x68] sm:$0xff]
    %v56 = vld [vmem:[#allocation5 + $0x70] sm:$0xff]
    %v57 = vld [vmem:[#allocation5 + $0x78] sm:$0xff]
    %v58 = vld [vmem:[%s2] sm:$0x1]
    %v59 = vlaneseq
    %v60 = vshrl.u32 %v59, 7
    %v61 = vsub.s32 0, %v60
    %v62 = vrot.slane %v58, %v61
    %v63 = vld [vmem:[%s2 + $0x1] sm:$0x1]
    %v64 = vlaneseq
    %v65 = vshrl.u32 %v64, 7
    %v66 = vsub.s32 0, %v65
    %v67 = vrot.slane %v63, %v66
    %v68 = vld [vmem:[%s2 + $0x2] sm:$0x1]
    %v69 = vlaneseq
    %v70 = vshrl.u32 %v69, 7
    %v71 = vsub.s32 0, %v70
    %v72 = vrot.slane %v68, %v71
    %v73 = vld [vmem:[%s2 + $0x3] sm:$0x1]
    %v74 = vlaneseq
    %v75 = vshrl.u32 %v74, 7
    %v76 = vsub.s32 0, %v75
    %v77 = vrot.slane %v73, %v76
    %79 = vset.pattern.permute.xlu0 0
    %80 = vperm.xlu0 %79, %v41
    %v81 = vpop.permute.xlu0 %80
    %v83 = vmul.f32 %v81, %v62
    %v84 = vadd.f32 %v83, %v67
    %vm85 = vcmask 261120
    %v87 = vsel %vm85, 0.0, 0
    %89 = vmatprep.subr.mxu0 0.0
    %90 = vmatpush1.msra.mxu0 %v42
    %91 = vmatprep.subr.mxu0 0.0
    %92 = vmatpush1.msra.mxu0 %v43
    %93 = vmatprep.subr.mxu0 0.0
    %94 = vmatpush1.msra.mxu0 %v44
    %95 = vmatprep.subr.mxu0 0.0
    %96 = vmatpush1.msra.mxu0 %v45
    %97 = vmatprep.subr.mxu0 0.0
    %98 = vmatpush1.msra.mxu0 0.0
    %99 = vmatprep.subr.mxu0 0.0
    %100 = vmatpush1.msra.mxu0 0.0
    %101 = vmatprep.subr.mxu0 0.0
    %102 = vmatpush1.msra.mxu0 0.0
    %103 = vmatprep.subr.mxu0 0.0
    %104 = vmatpush1.msra.mxu0 0.0
    %105 = vmatprep.subr.mxu0 0.0
    %106 = vmatpush1.msra.mxu0 0.0
    %107 = vmatprep.subr.mxu0 0.0
    %108 = vmatpush1.msra.mxu0 0.0
    %109 = vmatprep.subr.mxu0 0.0
    %110 = vmatpush1.msra.mxu0 0.0
    %111 = vmatprep.subr.mxu0 0.0
    %112 = vmatpush1.msra.mxu0 0.0
    %113 = vmatprep.subr.mxu0 0.0
    %114 = vmatpush1.msra.mxu0 0.0
    %115 = vmatprep.subr.mxu0 0.0
    %116 = vmatpush1.msra.mxu0 0.0
    %117 = vmatprep.subr.mxu0 0.0
    %118 = vmatpush1.msra.mxu0 0.0
    %119 = vmatprep.subr.mxu0 0.0
    %120 = vmatpush1.msra.mxu0 0.0
    %121 = vmatprep.subr.mxu0 0.0
    %122 = vmatpush1.msra.mxu0 0.0
    %123 = vmatprep.subr.mxu0 0.0
    %124 = vmatpush1.msra.mxu0 0.0
    %125 = vmatprep.subr.mxu0 0.0
    %126 = vmatpush1.msra.mxu0 0.0
    %127 = vmatprep.subr.mxu0 0.0
    %128 = vmatpush1.msra.mxu0 0.0
    %129 = vmatprep.subr.mxu0 0.0
    %130 = vmatpush1.msra.mxu0 0.0
    %131 = vmatprep.subr.mxu0 0.0
    %132 = vmatpush1.msra.mxu0 0.0
    %133 = vmatprep.subr.mxu0 0.0
    %134 = vmatpush1.msra.mxu0 0.0
    %135 = vmatprep.subr.mxu0 0.0
    %136 = vmatpush1.msra.mxu0 0.0
    %137 = vmatprep.subr.mxu0 0.0
    %138 = vmatpush1.msra.mxu0 0.0
    %139 = vmatprep.subr.mxu0 0.0
    %140 = vmatpush1.msra.mxu0 0.0
    %141 = vmatprep.subr.mxu0 0.0
    %142 = vmatpush1.msra.mxu0 0.0
    %143 = vmatprep.subr.mxu0 0.0
    %144 = vmatpush1.msra.mxu0 0.0
    %145 = vmatprep.subr.mxu0 0.0
    %146 = vmatpush1.msra.mxu0 0.0
    %147 = vmatprep.subr.mxu0 0.0
    %148 = vmatpush1.msra.mxu0 0.0
    %149 = vmatprep.subr.mxu0 0.0
    %150 = vmatpush1.msra.mxu0 0.0
    %151 = vmatprep.subr.mxu0 0.0
    %152 = vmatpush1.msra.mxu0 0.0
    %153 = vmatprep.mubr.f32.mxu0 0.0
    %154 = vmatmul.mubr.f32.gmra.mrb[0].mxu0 %v87
    %v155 = vpop.f32.mrb[0].mxu0
    %v156 = vadd.f32 0.0, %v155
    %v157 = vpop.f32.mrb[0].mxu0
    %158 = vdwg.mxu0
    %v159 = vadd.f32 %v84, %v156
    %v160 = vxor.u32 %v159, 2147483648
    %v161 = vmul.f32 %v160, 1.442695
    %v162 = vpow.pop %v161
    %v163 = vadd.f32 %v162, 1.0
    %v164 = vrcp.pop %v163
    %v165 = vmul.f32 1.0, %v164
    %v166 = vtanh.pop %v159
    %v167 = vmul.f32 %v165, 0.0
    %169 = vrot.lane.b32.xlu0 %v166, 64
    %v170 = vpop.permute.xlu0 %169
    %v172 = vmul.f32 %v165, %v170
    %174 = vrot.lane.b32.xlu0 %v172, 32
    %v175 = vpop.permute.xlu0 %174
    %v177 = vadd.f32 %v167, %v175
    %v178 = vtanh.pop %v177
    %180 = vrot.lane.b32.xlu0 %v178, 64
    %v181 = vpop.permute.xlu0 %180
    %v183 = vmul.f32 %v165, %v181
    %185 = vrot.lane.b32.xlu0 %v183, 32
    %v186 = vpop.permute.xlu0 %185
    %v187 = vsel %vm85, %v186, 0
    %189 = vmatprep.subr.mxu0 0.0
    %190 = vmatpush1.msra.mxu0 %v46
    %191 = vmatprep.subr.mxu0 0.0
    %192 = vmatpush1.msra.mxu0 %v47
    %193 = vmatprep.subr.mxu0 0.0
    %194 = vmatpush1.msra.mxu0 %v48
    %195 = vmatprep.subr.mxu0 0.0
    %196 = vmatpush1.msra.mxu0 %v49
    %197 = vmatprep.subr.mxu0 0.0
    %198 = vmatpush1.msra.mxu0 0.0
    %199 = vmatprep.subr.mxu0 0.0
    %200 = vmatpush1.msra.mxu0 0.0
    %201 = vmatprep.subr.mxu0 0.0
    %202 = vmatpush1.msra.mxu0 0.0
    %203 = vmatprep.subr.mxu0 0.0
    %204 = vmatpush1.msra.mxu0 0.0
    %205 = vmatprep.subr.mxu0 0.0
    %206 = vmatpush1.msra.mxu0 0.0
    %207 = vmatprep.subr.mxu0 0.0
    %208 = vmatpush1.msra.mxu0 0.0
    %209 = vmatprep.subr.mxu0 0.0
    %210 = vmatpush1.msra.mxu0 0.0
    %211 = vmatprep.subr.mxu0 0.0
    %212 = vmatpush1.msra.mxu0 0.0
    %213 = vmatprep.subr.mxu0 0.0
    %214 = vmatpush1.msra.mxu0 0.0
    %215 = vmatprep.subr.mxu0 0.0
    %216 = vmatpush1.msra.mxu0 0.0
    %217 = vmatprep.subr.mxu0 0.0
    %218 = vmatpush1.msra.mxu0 0.0
    %219 = vmatprep.subr.mxu0 0.0
    %220 = vmatpush1.msra.mxu0 0.0
    %221 = vmatprep.subr.mxu0 0.0
    %222 = vmatpush1.msra.mxu0 0.0
    %223 = vmatprep.subr.mxu0 0.0
    %224 = vmatpush1.msra.mxu0 0.0
    %225 = vmatprep.subr.mxu0 0.0
    %226 = vmatpush1.msra.mxu0 0.0
    %227 = vmatprep.subr.mxu0 0.0
    %228 = vmatpush1.msra.mxu0 0.0
    %229 = vmatprep.subr.mxu0 0.0
    %230 = vmatpush1.msra.mxu0 0.0
    %231 = vmatprep.subr.mxu0 0.0
    %232 = vmatpush1.msra.mxu0 0.0
    %233 = vmatprep.subr.mxu0 0.0
    %234 = vmatpush1.msra.mxu0 0.0
    %235 = vmatprep.subr.mxu0 0.0
    %236 = vmatpush1.msra.mxu0 0.0
    %237 = vmatprep.subr.mxu0 0.0
    %238 = vmatpush1.msra.mxu0 0.0
    %239 = vmatprep.subr.mxu0 0.0
    %240 = vmatpush1.msra.mxu0 0.0
    %241 = vmatprep.subr.mxu0 0.0
    %242 = vmatpush1.msra.mxu0 0.0
    %243 = vmatprep.subr.mxu0 0.0
    %244 = vmatpush1.msra.mxu0 0.0
    %245 = vmatprep.subr.mxu0 0.0
    %246 = vmatpush1.msra.mxu0 0.0
    %247 = vmatprep.subr.mxu0 0.0
    %248 = vmatpush1.msra.mxu0 0.0
    %249 = vmatprep.subr.mxu0 0.0
    %250 = vmatpush1.msra.mxu0 0.0
    %251 = vmatprep.subr.mxu0 0.0
    %252 = vmatpush1.msra.mxu0 0.0
    %253 = vmatprep.mubr.f32.mxu0 0.0
    %254 = vmatmul.mubr.f32.gmra.mrb[0].mxu0 %v187
    %v255 = vpop.f32.mrb[0].mxu0
    %v256 = vadd.f32 0.0, %v255
    %v257 = vpop.f32.mrb[0].mxu0
    %258 = vdwg.mxu0
    %259 = vmatprep.subr.mxu0 0.0
    %260 = vmatpush1.msra.mxu0 %v50
    %261 = vmatprep.subr.mxu0 0.0
    %262 = vmatpush1.msra.mxu0 %v51
    %263 = vmatprep.subr.mxu0 0.0
    %264 = vmatpush1.msra.mxu0 %v52
    %265 = vmatprep.subr.mxu0 0.0
    %266 = vmatpush1.msra.mxu0 %v53
    %267 = vmatprep.subr.mxu0 0.0
    %268 = vmatpush1.msra.mxu0 0.0
    %269 = vmatprep.subr.mxu0 0.0
    %270 = vmatpush1.msra.mxu0 0.0
    %271 = vmatprep.subr.mxu0 0.0
    %272 = vmatpush1.msra.mxu0 0.0
    %273 = vmatprep.subr.mxu0 0.0
    %274 = vmatpush1.msra.mxu0 0.0
    %275 = vmatprep.subr.mxu0 0.0
    %276 = vmatpush1.msra.mxu0 0.0
    %277 = vmatprep.subr.mxu0 0.0
    %278 = vmatpush1.msra.mxu0 0.0
    %279 = vmatprep.subr.mxu0 0.0
    %280 = vmatpush1.msra.mxu0 0.0
    %281 = vmatprep.subr.mxu0 0.0
    %282 = vmatpush1.msra.mxu0 0.0
    %283 = vmatprep.subr.mxu0 0.0
    %284 = vmatpush1.msra.mxu0 0.0
    %285 = vmatprep.subr.mxu0 0.0
    %286 = vmatpush1.msra.mxu0 0.0
    %287 = vmatprep.subr.mxu0 0.0
    %288 = vmatpush1.msra.mxu0 0.0
    %289 = vmatprep.subr.mxu0 0.0
    %290 = vmatpush1.msra.mxu0 0.0
    %291 = vmatprep.subr.mxu0 0.0
    %292 = vmatpush1.msra.mxu0 0.0
    %293 = vmatprep.subr.mxu0 0.0
    %294 = vmatpush1.msra.mxu0 0.0
    %295 = vmatprep.subr.mxu0 0.0
    %296 = vmatpush1.msra.mxu0 0.0
    %297 = vmatprep.subr.mxu0 0.0
    %298 = vmatpush1.msra.mxu0 0.0
    %299 = vmatprep.subr.mxu0 0.0
    %300 = vmatpush1.msra.mxu0 0.0
    %301 = vmatprep.subr.mxu0 0.0
    %302 = vmatpush1.msra.mxu0 0.0
    %303 = vmatprep.subr.mxu0 0.0
    %304 = vmatpush1.msra.mxu0 0.0
    %305 = vmatprep.subr.mxu0 0.0
    %306 = vmatpush1.msra.mxu0 0.0
    %307 = vmatprep.subr.mxu0 0.0
    %308 = vmatpush1.msra.mxu0 0.0
    %309 = vmatprep.subr.mxu0 0.0
    %310 = vmatpush1.msra.mxu0 0.0
    %311 = vmatprep.subr.mxu0 0.0
    %312 = vmatpush1.msra.mxu0 0.0
    %313 = vmatprep.subr.mxu0 0.0
    %314 = vmatpush1.msra.mxu0 0.0
    %315 = vmatprep.subr.mxu0 0.0
    %316 = vmatpush1.msra.mxu0 0.0
    %317 = vmatprep.subr.mxu0 0.0
    %318 = vmatpush1.msra.mxu0 0.0
    %319 = vmatprep.subr.mxu0 0.0
    %320 = vmatpush1.msra.mxu0 0.0
    %321 = vmatprep.subr.mxu0 0.0
    %322 = vmatpush1.msra.mxu0 0.0
    %323 = vmatprep.mubr.f32.mxu0 0.0
    %324 = vmatmul.mubr.f32.gmra.mrb[0].mxu0 %v87
    %v325 = vpop.f32.mrb[0].mxu0
    %v326 = vadd.f32 %v256, %v325
    %v327 = vpop.f32.mrb[0].mxu0
    %328 = vdwg.mxu0
    %v329 = vadd.f32 %v326, %v72
    %v330 = vxor.u32 %v329, 2147483648
    %v331 = vmul.f32 %v330, 1.442695
    %v332 = vpow.pop %v331
    %v333 = vadd.f32 %v332, 1.0
    %v334 = vrcp.pop %v333
    %v335 = vmul.f32 1.0, %v334
    %v336 = vtanh.pop %v329
    %v337 = vmul.f32 %v335, 0.0
    %339 = vrot.lane.b32.xlu0 %v336, 64
    %v340 = vpop.permute.xlu0 %339
    %v342 = vmul.f32 %v335, %v340
    %344 = vrot.lane.b32.xlu0 %v342, 32
    %v345 = vpop.permute.xlu0 %344
    %v347 = vadd.f32 %v337, %v345
    %v348 = vtanh.pop %v347
    %350 = vrot.lane.b32.xlu0 %v348, 64
    %v351 = vpop.permute.xlu0 %350
    %v353 = vmul.f32 %v335, %v351
    %354 = vset.pattern.permute.xlu0 1
    %355 = vperm.xlu0 %354, %v41
    %v356 = vpop.permute.xlu0 %355
    %v358 = vmul.f32 %v356, %v62
    %v359 = vadd.f32 %v358, %v67
    %360 = vmatprep.subr.mxu0 0.0
    %361 = vmatpush1.msra.mxu0 %v42
    %362 = vmatprep.subr.mxu0 0.0
    %363 = vmatpush1.msra.mxu0 %v43
    %364 = vmatprep.subr.mxu0 0.0
    %365 = vmatpush1.msra.mxu0 %v44
    %366 = vmatprep.subr.mxu0 0.0
    %367 = vmatpush1.msra.mxu0 %v45
    %368 = vmatprep.subr.mxu0 0.0
    %369 = vmatpush1.msra.mxu0 0.0
    %370 = vmatprep.subr.mxu0 0.0
    %371 = vmatpush1.msra.mxu0 0.0
    %372 = vmatprep.subr.mxu0 0.0
    %373 = vmatpush1.msra.mxu0 0.0
    %374 = vmatprep.subr.mxu0 0.0
    %375 = vmatpush1.msra.mxu0 0.0
    %376 = vmatprep.subr.mxu0 0.0
    %377 = vmatpush1.msra.mxu0 0.0
    %378 = vmatprep.subr.mxu0 0.0
    %379 = vmatpush1.msra.mxu0 0.0
    %380 = vmatprep.subr.mxu0 0.0
    %381 = vmatpush1.msra.mxu0 0.0
    %382 = vmatprep.subr.mxu0 0.0
    %383 = vmatpush1.msra.mxu0 0.0
    %384 = vmatprep.subr.mxu0 0.0
    %385 = vmatpush1.msra.mxu0 0.0
    %386 = vmatprep.subr.mxu0 0.0
    %387 = vmatpush1.msra.mxu0 0.0
    %388 = vmatprep.subr.mxu0 0.0
    %389 = vmatpush1.msra.mxu0 0.0
    %390 = vmatprep.subr.mxu0 0.0
    %391 = vmatpush1.msra.mxu0 0.0
    %392 = vmatprep.subr.mxu0 0.0
    %393 = vmatpush1.msra.mxu0 0.0
    %394 = vmatprep.subr.mxu0 0.0
    %395 = vmatpush1.msra.mxu0 0.0
    %396 = vmatprep.subr.mxu0 0.0
    %397 = vmatpush1.msra.mxu0 0.0
    %398 = vmatprep.subr.mxu0 0.0
    %399 = vmatpush1.msra.mxu0 0.0
    %400 = vmatprep.subr.mxu0 0.0
    %401 = vmatpush1.msra.mxu0 0.0
    %402 = vmatprep.subr.mxu0 0.0
    %403 = vmatpush1.msra.mxu0 0.0
    %404 = vmatprep.subr.mxu0 0.0
    %405 = vmatpush1.msra.mxu0 0.0
    %406 = vmatprep.subr.mxu0 0.0
    %407 = vmatpush1.msra.mxu0 0.0
    %408 = vmatprep.subr.mxu0 0.0
    %409 = vmatpush1.msra.mxu0 0.0
    %410 = vmatprep.subr.mxu0 0.0
    %411 = vmatpush1.msra.mxu0 0.0
    %412 = vmatprep.subr.mxu0 0.0
    %413 = vmatpush1.msra.mxu0 0.0
    %414 = vmatprep.subr.mxu0 0.0
    %415 = vmatpush1.msra.mxu0 0.0
    %416 = vmatprep.subr.mxu0 0.0
    %417 = vmatpush1.msra.mxu0 0.0
    %418 = vmatprep.subr.mxu0 0.0
    %419 = vmatpush1.msra.mxu0 0.0
    %420 = vmatprep.subr.mxu0 0.0
    %421 = vmatpush1.msra.mxu0 0.0
    %422 = vmatprep.subr.mxu0 0.0
    %423 = vmatpush1.msra.mxu0 0.0
    %424 = vmatprep.mubr.f32.mxu0 0.0
    %425 = vmatmul.mubr.f32.gmra.mrb[0].mxu0 %v187
    %v426 = vpop.f32.mrb[0].mxu0
    %v427 = vadd.f32 0.0, %v426
    %v428 = vpop.f32.mrb[0].mxu0
    %429 = vdwg.mxu0
    %v430 = vadd.f32 %v359, %v427
    %v431 = vxor.u32 %v430, 2147483648
    %v432 = vmul.f32 %v431, 1.442695
    %v433 = vpow.pop %v432
    %v434 = vadd.f32 %v433, 1.0
    %v435 = vrcp.pop %v434
    %v436 = vmul.f32 1.0, %v435
    %v437 = vtanh.pop %v430
    %v438 = vmul.f32 %v436, %v177
    %440 = vrot.lane.b32.xlu0 %v437, 64
    %v441 = vpop.permute.xlu0 %440
    %v443 = vmul.f32 %v436, %v441
    %445 = vrot.lane.b32.xlu0 %v443, 32
    %v446 = vpop.permute.xlu0 %445
    %v448 = vadd.f32 %v438, %v446
    %v449 = vtanh.pop %v448
    %451 = vrot.lane.b32.xlu0 %v449, 64
    %v452 = vpop.permute.xlu0 %451
    %v454 = vmul.f32 %v436, %v452
    %456 = vrot.lane.b32.xlu0 %v454, 32
    %v457 = vpop.permute.xlu0 %456
    %v458 = vsel %vm85, %v457, 0
    %460 = vmatprep.subr.mxu0 0.0
    %461 = vmatpush1.msra.mxu0 %v46
    %462 = vmatprep.subr.mxu0 0.0
    %463 = vmatpush1.msra.mxu0 %v47
    %464 = vmatprep.subr.mxu0 0.0
    %465 = vmatpush1.msra.mxu0 %v48
    %466 = vmatprep.subr.mxu0 0.0
    %467 = vmatpush1.msra.mxu0 %v49
    %468 = vmatprep.subr.mxu0 0.0
    %469 = vmatpush1.msra.mxu0 0.0
    %470 = vmatprep.subr.mxu0 0.0
    %471 = vmatpush1.msra.mxu0 0.0
    %472 = vmatprep.subr.mxu0 0.0
    %473 = vmatpush1.msra.mxu0 0.0
    %474 = vmatprep.subr.mxu0 0.0
    %475 = vmatpush1.msra.mxu0 0.0
    %476 = vmatprep.subr.mxu0 0.0
    %477 = vmatpush1.msra.mxu0 0.0
    %478 = vmatprep.subr.mxu0 0.0
    %479 = vmatpush1.msra.mxu0 0.0
    %480 = vmatprep.subr.mxu0 0.0
    %481 = vmatpush1.msra.mxu0 0.0
    %482 = vmatprep.subr.mxu0 0.0
    %483 = vmatpush1.msra.mxu0 0.0
    %484 = vmatprep.subr.mxu0 0.0
    %485 = vmatpush1.msra.mxu0 0.0
    %486 = vmatprep.subr.mxu0 0.0
    %487 = vmatpush1.msra.mxu0 0.0
    %488 = vmatprep.subr.mxu0 0.0
    %489 = vmatpush1.msra.mxu0 0.0
    %490 = vmatprep.subr.mxu0 0.0
    %491 = vmatpush1.msra.mxu0 0.0
    %492 = vmatprep.subr.mxu0 0.0
    %493 = vmatpush1.msra.mxu0 0.0
    %494 = vmatprep.subr.mxu0 0.0
    %495 = vmatpush1.msra.mxu0 0.0
    %496 = vmatprep.subr.mxu0 0.0
    %497 = vmatpush1.msra.mxu0 0.0
    %498 = vmatprep.subr.mxu0 0.0
    %499 = vmatpush1.msra.mxu0 0.0
    %500 = vmatprep.subr.mxu0 0.0
    %501 = vmatpush1.msra.mxu0 0.0
    %502 = vmatprep.subr.mxu0 0.0
    %503 = vmatpush1.msra.mxu0 0.0
    %504 = vmatprep.subr.mxu0 0.0
    %505 = vmatpush1.msra.mxu0 0.0
    %506 = vmatprep.subr.mxu0 0.0
    %507 = vmatpush1.msra.mxu0 0.0
    %508 = vmatprep.subr.mxu0 0.0
    %509 = vmatpush1.msra.mxu0 0.0
    %510 = vmatprep.subr.mxu0 0.0
    %511 = vmatpush1.msra.mxu0 0.0
    %512 = vmatprep.subr.mxu0 0.0
    %513 = vmatpush1.msra.mxu0 0.0
    %514 = vmatprep.subr.mxu0 0.0
    %515 = vmatpush1.msra.mxu0 0.0
    %516 = vmatprep.subr.mxu0 0.0
    %517 = vmatpush1.msra.mxu0 0.0
    %518 = vmatprep.subr.mxu0 0.0
    %519 = vmatpush1.msra.mxu0 0.0
    %520 = vmatprep.subr.mxu0 0.0
    %521 = vmatpush1.msra.mxu0 0.0
    %522 = vmatprep.subr.mxu0 0.0
    %523 = vmatpush1.msra.mxu0 0.0
    %524 = vmatprep.mubr.f32.mxu0 0.0
    %525 = vmatmul.mubr.f32.gmra.mrb[0].mxu0 %v458
    %v526 = vpop.f32.mrb[0].mxu0
    %v527 = vadd.f32 0.0, %v526
    %v528 = vpop.f32.mrb[0].mxu0
    %529 = vdwg.mxu0
    %531 = vrot.lane.b32.xlu0 %v353, 32
    %v532 = vpop.permute.xlu0 %531
    %v533 = vsel %vm85, %v532, 0
    %535 = vmatprep.subr.mxu0 0.0
    %536 = vmatpush1.msra.mxu0 %v50
    %537 = vmatprep.subr.mxu0 0.0
    %538 = vmatpush1.msra.mxu0 %v51
    %539 = vmatprep.subr.mxu0 0.0
    %540 = vmatpush1.msra.mxu0 %v52
    %541 = vmatprep.subr.mxu0 0.0
    %542 = vmatpush1.msra.mxu0 %v53
    %543 = vmatprep.subr.mxu0 0.0
    %544 = vmatpush1.msra.mxu0 0.0
    %545 = vmatprep.subr.mxu0 0.0
    %546 = vmatpush1.msra.mxu0 0.0
    %547 = vmatprep.subr.mxu0 0.0
    %548 = vmatpush1.msra.mxu0 0.0
    %549 = vmatprep.subr.mxu0 0.0
    %550 = vmatpush1.msra.mxu0 0.0
    %551 = vmatprep.subr.mxu0 0.0
    %552 = vmatpush1.msra.mxu0 0.0
    %553 = vmatprep.subr.mxu0 0.0
    %554 = vmatpush1.msra.mxu0 0.0
    %555 = vmatprep.subr.mxu0 0.0
    %556 = vmatpush1.msra.mxu0 0.0
    %557 = vmatprep.subr.mxu0 0.0
    %558 = vmatpush1.msra.mxu0 0.0
    %559 = vmatprep.subr.mxu0 0.0
    %560 = vmatpush1.msra.mxu0 0.0
    %561 = vmatprep.subr.mxu0 0.0
    %562 = vmatpush1.msra.mxu0 0.0
    %563 = vmatprep.subr.mxu0 0.0
    %564 = vmatpush1.msra.mxu0 0.0
    %565 = vmatprep.subr.mxu0 0.0
    %566 = vmatpush1.msra.mxu0 0.0
    %567 = vmatprep.subr.mxu0 0.0
    %568 = vmatpush1.msra.mxu0 0.0
    %569 = vmatprep.subr.mxu0 0.0
    %570 = vmatpush1.msra.mxu0 0.0
    %571 = vmatprep.subr.mxu0 0.0
    %572 = vmatpush1.msra.mxu0 0.0
    %573 = vmatprep.subr.mxu0 0.0
    %574 = vmatpush1.msra.mxu0 0.0
    %575 = vmatprep.subr.mxu0 0.0
    %576 = vmatpush1.msra.mxu0 0.0
    %577 = vmatprep.subr.mxu0 0.0
    %578 = vmatpush1.msra.mxu0 0.0
    %579 = vmatprep.subr.mxu0 0.0
    %580 = vmatpush1.msra.mxu0 0.0
    %581 = vmatprep.subr.mxu0 0.0
    %582 = vmatpush1.msra.mxu0 0.0
    %583 = vmatprep.subr.mxu0 0.0
    %584 = vmatpush1.msra.mxu0 0.0
    %585 = vmatprep.subr.mxu0 0.0
    %586 = vmatpush1.msra.mxu0 0.0
    %587 = vmatprep.subr.mxu0 0.0
    %588 = vmatpush1.msra.mxu0 0.0
    %589 = vmatprep.subr.mxu0 0.0
    %590 = vmatpush1.msra.mxu0 0.0
    %591 = vmatprep.subr.mxu0 0.0
    %592 = vmatpush1.msra.mxu0 0.0
    %593 = vmatprep.subr.mxu0 0.0
    %594 = vmatpush1.msra.mxu0 0.0
    %595 = vmatprep.subr.mxu0 0.0
    %596 = vmatpush1.msra.mxu0 0.0
    %597 = vmatprep.subr.mxu0 0.0
    %598 = vmatpush1.msra.mxu0 0.0
    %599 = vmatprep.mubr.f32.mxu0 0.0
    %600 = vmatmul.mubr.f32.gmra.mrb[0].mxu0 %v533
    %v601 = vpop.f32.mrb[0].mxu0
    %v602 = vadd.f32 %v527, %v601
    %v603 = vpop.f32.mrb[0].mxu0
    %604 = vdwg.mxu0
    %v605 = vadd.f32 %v602, %v72
    %v606 = vxor.u32 %v605, 2147483648
    %v607 = vmul.f32 %v606, 1.442695
    %v608 = vpow.pop %v607
    %v609 = vadd.f32 %v608, 1.0
    %v610 = vrcp.pop %v609
    %v611 = vmul.f32 1.0, %v610
    %v612 = vtanh.pop %v605
    %v613 = vmul.f32 %v611, %v347
    %615 = vrot.lane.b32.xlu0 %v612, 64
    %v616 = vpop.permute.xlu0 %615
    %v618 = vmul.f32 %v611, %v616
    %620 = vrot.lane.b32.xlu0 %v618, 32
    %v621 = vpop.permute.xlu0 %620
    %v623 = vadd.f32 %v613, %v621
    %v624 = vtanh.pop %v623
    %626 = vrot.lane.b32.xlu0 %v624, 64
    %v627 = vpop.permute.xlu0 %626
    %v629 = vmul.f32 %v611, %v627
    %630 = vset.pattern.permute.xlu0 2
    %631 = vperm.xlu0 %630, %v41
    %v632 = vpop.permute.xlu0 %631
    %v634 = vmul.f32 %v632, %v62
    %v635 = vadd.f32 %v634, %v67
    %636 = vmatprep.subr.mxu0 0.0
    %637 = vmatpush1.msra.mxu0 %v42
    %638 = vmatprep.subr.mxu0 0.0
    %639 = vmatpush1.msra.mxu0 %v43
    %640 = vmatprep.subr.mxu0 0.0
    %641 = vmatpush1.msra.mxu0 %v44
    %642 = vmatprep.subr.mxu0 0.0
    %643 = vmatpush1.msra.mxu0 %v45
    %644 = vmatprep.subr.mxu0 0.0
    %645 = vmatpush1.msra.mxu0 0.0
    %646 = vmatprep.subr.mxu0 0.0
    %647 = vmatpush1.msra.mxu0 0.0
    %648 = vmatprep.subr.mxu0 0.0
    %649 = vmatpush1.msra.mxu0 0.0
    %650 = vmatprep.subr.mxu0 0.0
    %651 = vmatpush1.msra.mxu0 0.0
    %652 = vmatprep.subr.mxu0 0.0
    %653 = vmatpush1.msra.mxu0 0.0
    %654 = vmatprep.subr.mxu0 0.0
    %655 = vmatpush1.msra.mxu0 0.0
    %656 = vmatprep.subr.mxu0 0.0
    %657 = vmatpush1.msra.mxu0 0.0
    %658 = vmatprep.subr.mxu0 0.0
    %659 = vmatpush1.msra.mxu0 0.0
    %660 = vmatprep.subr.mxu0 0.0
    %661 = vmatpush1.msra.mxu0 0.0
    %662 = vmatprep.subr.mxu0 0.0
    %663 = vmatpush1.msra.mxu0 0.0
    %664 = vmatprep.subr.mxu0 0.0
    %665 = vmatpush1.msra.mxu0 0.0
    %666 = vmatprep.subr.mxu0 0.0
    %667 = vmatpush1.msra.mxu0 0.0
    %668 = vmatprep.subr.mxu0 0.0
    %669 = vmatpush1.msra.mxu0 0.0
    %670 = vmatprep.subr.mxu0 0.0
    %671 = vmatpush1.msra.mxu0 0.0
    %672 = vmatprep.subr.mxu0 0.0
    %673 = vmatpush1.msra.mxu0 0.0
    %674 = vmatprep.subr.mxu0 0.0
    %675 = vmatpush1.msra.mxu0 0.0
    %676 = vmatprep.subr.mxu0 0.0
    %677 = vmatpush1.msra.mxu0 0.0
    %678 = vmatprep.subr.mxu0 0.0
    %679 = vmatpush1.msra.mxu0 0.0
    %680 = vmatprep.subr.mxu0 0.0
    %681 = vmatpush1.msra.mxu0 0.0
    %682 = vmatprep.subr.mxu0 0.0
    %683 = vmatpush1.msra.mxu0 0.0
    %684 = vmatprep.subr.mxu0 0.0
    %685 = vmatpush1.msra.mxu0 0.0
    %686 = vmatprep.subr.mxu0 0.0
    %687 = vmatpush1.msra.mxu0 0.0
    %688 = vmatprep.subr.mxu0 0.0
    %689 = vmatpush1.msra.mxu0 0.0
    %690 = vmatprep.subr.mxu0 0.0
    %691 = vmatpush1.msra.mxu0 0.0
    %692 = vmatprep.subr.mxu0 0.0
    %693 = vmatpush1.msra.mxu0 0.0
    %694 = vmatprep.subr.mxu0 0.0
    %695 = vmatpush1.msra.mxu0 0.0
    %696 = vmatprep.subr.mxu0 0.0
    %697 = vmatpush1.msra.mxu0 0.0
    %698 = vmatprep.subr.mxu0 0.0
    %699 = vmatpush1.msra.mxu0 0.0
    %700 = vmatprep.mubr.f32.mxu0 0.0
    %701 = vmatmul.mubr.f32.gmra.mrb[0].mxu0 %v458
    %v702 = vpop.f32.mrb[0].mxu0
    %v703 = vadd.f32 0.0, %v702
    %v704 = vpop.f32.mrb[0].mxu0
    %705 = vdwg.mxu0
    %v706 = vadd.f32 %v635, %v703
    %v707 = vxor.u32 %v706, 2147483648
    %v708 = vmul.f32 %v707, 1.442695
    %v709 = vpow.pop %v708
    %v710 = vadd.f32 %v709, 1.0
    %v711 = vrcp.pop %v710
    %v712 = vmul.f32 1.0, %v711
    %v713 = vtanh.pop %v706
    %v714 = vmul.f32 %v712, %v448
    %716 = vrot.lane.b32.xlu0 %v713, 64
    %v717 = vpop.permute.xlu0 %716
    %v719 = vmul.f32 %v712, %v717
    %721 = vrot.lane.b32.xlu0 %v719, 32
    %v722 = vpop.permute.xlu0 %721
    %v724 = vadd.f32 %v714, %v722
    %v725 = vtanh.pop %v724
    %727 = vrot.lane.b32.xlu0 %v725, 64
    %v728 = vpop.permute.xlu0 %727
    %v730 = vmul.f32 %v712, %v728
    %732 = vrot.lane.b32.xlu0 %v730, 32
    %v733 = vpop.permute.xlu0 %732
    %v734 = vsel %vm85, %v733, 0
    %736 = vmatprep.subr.mxu0 0.0
    %737 = vmatpush1.msra.mxu0 %v46
    %738 = vmatprep.subr.mxu0 0.0
    %739 = vmatpush1.msra.mxu0 %v47
    %740 = vmatprep.subr.mxu0 0.0
    %741 = vmatpush1.msra.mxu0 %v48
    %742 = vmatprep.subr.mxu0 0.0
    %743 = vmatpush1.msra.mxu0 %v49
    %744 = vmatprep.subr.mxu0 0.0
    %745 = vmatpush1.msra.mxu0 0.0
    %746 = vmatprep.subr.mxu0 0.0
    %747 = vmatpush1.msra.mxu0 0.0
    %748 = vmatprep.subr.mxu0 0.0
    %749 = vmatpush1.msra.mxu0 0.0
    %750 = vmatprep.subr.mxu0 0.0
    %751 = vmatpush1.msra.mxu0 0.0
    %752 = vmatprep.subr.mxu0 0.0
    %753 = vmatpush1.msra.mxu0 0.0
    %754 = vmatprep.subr.mxu0 0.0
    %755 = vmatpush1.msra.mxu0 0.0
    %756 = vmatprep.subr.mxu0 0.0
    %757 = vmatpush1.msra.mxu0 0.0
    %758 = vmatprep.subr.mxu0 0.0
    %759 = vmatpush1.msra.mxu0 0.0
    %760 = vmatprep.subr.mxu0 0.0
    %761 = vmatpush1.msra.mxu0 0.0
    %762 = vmatprep.subr.mxu0 0.0
    %763 = vmatpush1.msra.mxu0 0.0
    %764 = vmatprep.subr.mxu0 0.0
    %765 = vmatpush1.msra.mxu0 0.0
    %766 = vmatprep.subr.mxu0 0.0
    %767 = vmatpush1.msra.mxu0 0.0
    %768 = vmatprep.subr.mxu0 0.0
    %769 = vmatpush1.msra.mxu0 0.0
    %770 = vmatprep.subr.mxu0 0.0
    %771 = vmatpush1.msra.mxu0 0.0
    %772 = vmatprep.subr.mxu0 0.0
    %773 = vmatpush1.msra.mxu0 0.0
    %774 = vmatprep.subr.mxu0 0.0
    %775 = vmatpush1.msra.mxu0 0.0
    %776 = vmatprep.subr.mxu0 0.0
    %777 = vmatpush1.msra.mxu0 0.0
    %778 = vmatprep.subr.mxu0 0.0
    %779 = vmatpush1.msra.mxu0 0.0
    %780 = vmatprep.subr.mxu0 0.0
    %781 = vmatpush1.msra.mxu0 0.0
    %782 = vmatprep.subr.mxu0 0.0
    %783 = vmatpush1.msra.mxu0 0.0
    %784 = vmatprep.subr.mxu0 0.0
    %785 = vmatpush1.msra.mxu0 0.0
    %786 = vmatprep.subr.mxu0 0.0
    %787 = vmatpush1.msra.mxu0 0.0
    %788 = vmatprep.subr.mxu0 0.0
    %789 = vmatpush1.msra.mxu0 0.0
    %790 = vmatprep.subr.mxu0 0.0
    %791 = vmatpush1.msra.mxu0 0.0
    %792 = vmatprep.subr.mxu0 0.0
    %793 = vmatpush1.msra.mxu0 0.0
    %794 = vmatprep.subr.mxu0 0.0
    %795 = vmatpush1.msra.mxu0 0.0
    %796 = vmatprep.subr.mxu0 0.0
    %797 = vmatpush1.msra.mxu0 0.0
    %798 = vmatprep.subr.mxu0 0.0
    %799 = vmatpush1.msra.mxu0 0.0
    %800 = vmatprep.mubr.f32.mxu0 0.0
    %801 = vmatmul.mubr.f32.gmra.mrb[0].mxu0 %v734
    %v802 = vpop.f32.mrb[0].mxu0
    %v803 = vadd.f32 0.0, %v802
    %v804 = vpop.f32.mrb[0].mxu0
    %805 = vdwg.mxu0
    %807 = vrot.lane.b32.xlu0 %v629, 32
    %v808 = vpop.permute.xlu0 %807
    %v809 = vsel %vm85, %v808, 0
    %811 = vmatprep.subr.mxu0 0.0
    %812 = vmatpush1.msra.mxu0 %v50
    %813 = vmatprep.subr.mxu0 0.0
    %814 = vmatpush1.msra.mxu0 %v51
    %815 = vmatprep.subr.mxu0 0.0
    %816 = vmatpush1.msra.mxu0 %v52
    %817 = vmatprep.subr.mxu0 0.0
    %818 = vmatpush1.msra.mxu0 %v53
    %819 = vmatprep.subr.mxu0 0.0
    %820 = vmatpush1.msra.mxu0 0.0
    %821 = vmatprep.subr.mxu0 0.0
    %822 = vmatpush1.msra.mxu0 0.0
    %823 = vmatprep.subr.mxu0 0.0
    %824 = vmatpush1.msra.mxu0 0.0
    %825 = vmatprep.subr.mxu0 0.0
    %826 = vmatpush1.msra.mxu0 0.0
    %827 = vmatprep.subr.mxu0 0.0
    %828 = vmatpush1.msra.mxu0 0.0
    %829 = vmatprep.subr.mxu0 0.0
    %830 = vmatpush1.msra.mxu0 0.0
    %831 = vmatprep.subr.mxu0 0.0
    %832 = vmatpush1.msra.mxu0 0.0
    %833 = vmatprep.subr.mxu0 0.0
    %834 = vmatpush1.msra.mxu0 0.0
    %835 = vmatprep.subr.mxu0 0.0
    %836 = vmatpush1.msra.mxu0 0.0
    %837 = vmatprep.subr.mxu0 0.0
    %838 = vmatpush1.msra.mxu0 0.0
    %839 = vmatprep.subr.mxu0 0.0
    %840 = vmatpush1.msra.mxu0 0.0
    %841 = vmatprep.subr.mxu0 0.0
    %842 = vmatpush1.msra.mxu0 0.0
    %843 = vmatprep.subr.mxu0 0.0
    %844 = vmatpush1.msra.mxu0 0.0
    %845 = vmatprep.subr.mxu0 0.0
    %846 = vmatpush1.msra.mxu0 0.0
    %847 = vmatprep.subr.mxu0 0.0
    %848 = vmatpush1.msra.mxu0 0.0
    %849 = vmatprep.subr.mxu0 0.0
    %850 = vmatpush1.msra.mxu0 0.0
    %851 = vmatprep.subr.mxu0 0.0
    %852 = vmatpush1.msra.mxu0 0.0
    %853 = vmatprep.subr.mxu0 0.0
    %854 = vmatpush1.msra.mxu0 0.0
    %855 = vmatprep.subr.mxu0 0.0
    %856 = vmatpush1.msra.mxu0 0.0
    %857 = vmatprep.subr.mxu0 0.0
    %858 = vmatpush1.msra.mxu0 0.0
    %859 = vmatprep.subr.mxu0 0.0
    %860 = vmatpush1.msra.mxu0 0.0
    %861 = vmatprep.subr.mxu0 0.0
    %862 = vmatpush1.msra.mxu0 0.0
    %863 = vmatprep.subr.mxu0 0.0
    %864 = vmatpush1.msra.mxu0 0.0
    %865 = vmatprep.subr.mxu0 0.0
    %866 = vmatpush1.msra.mxu0 0.0
    %867 = vmatprep.subr.mxu0 0.0
    %868 = vmatpush1.msra.mxu0 0.0
    %869 = vmatprep.subr.mxu0 0.0
    %870 = vmatpush1.msra.mxu0 0.0
    %871 = vmatprep.subr.mxu0 0.0
    %872 = vmatpush1.msra.mxu0 0.0
    %873 = vmatprep.subr.mxu0 0.0
    %874 = vmatpush1.msra.mxu0 0.0
    %875 = vmatprep.mubr.f32.mxu0 0.0
    %876 = vmatmul.mubr.f32.gmra.mrb[0].mxu0 %v809
    %v877 = vpop.f32.mrb[0].mxu0
    %v878 = vadd.f32 %v803, %v877
    %v879 = vpop.f32.mrb[0].mxu0
    %880 = vdwg.mxu0
    %v881 = vadd.f32 %v878, %v72
    %v882 = vxor.u32 %v881, 2147483648
    %v883 = vmul.f32 %v882, 1.442695
    %v884 = vpow.pop %v883
    %v885 = vadd.f32 %v884, 1.0
    %v886 = vrcp.pop %v885
    %v887 = vmul.f32 1.0, %v886
    %v888 = vtanh.pop %v881
    %v889 = vmul.f32 %v887, %v623
    %891 = vrot.lane.b32.xlu0 %v888, 64
    %v892 = vpop.permute.xlu0 %891
    %v894 = vmul.f32 %v887, %v892
    %896 = vrot.lane.b32.xlu0 %v894, 32
    %v897 = vpop.permute.xlu0 %896
    %v899 = vadd.f32 %v889, %v897
    %v900 = vtanh.pop %v899
    %902 = vrot.lane.b32.xlu0 %v900, 64
    %v903 = vpop.permute.xlu0 %902
    %v905 = vmul.f32 %v887, %v903
    %906 = vset.pattern.permute.xlu0 3
    %907 = vperm.xlu0 %906, %v41
    %v908 = vpop.permute.xlu0 %907
    %v910 = vmul.f32 %v908, %v62
    %v911 = vadd.f32 %v910, %v67
    %912 = vmatprep.subr.mxu0 0.0
    %913 = vmatpush1.msra.mxu0 %v42
    %914 = vmatprep.subr.mxu0 0.0
    %915 = vmatpush1.msra.mxu0 %v43
    %916 = vmatprep.subr.mxu0 0.0
    %917 = vmatpush1.msra.mxu0 %v44
    %918 = vmatprep.subr.mxu0 0.0
    %919 = vmatpush1.msra.mxu0 %v45
    %920 = vmatprep.subr.mxu0 0.0
    %921 = vmatpush1.msra.mxu0 0.0
    %922 = vmatprep.subr.mxu0 0.0
    %923 = vmatpush1.msra.mxu0 0.0
    %924 = vmatprep.subr.mxu0 0.0
    %925 = vmatpush1.msra.mxu0 0.0
    %926 = vmatprep.subr.mxu0 0.0
    %927 = vmatpush1.msra.mxu0 0.0
    %928 = vmatprep.subr.mxu0 0.0
    %929 = vmatpush1.msra.mxu0 0.0
    %930 = vmatprep.subr.mxu0 0.0
    %931 = vmatpush1.msra.mxu0 0.0
    %932 = vmatprep.subr.mxu0 0.0
    %933 = vmatpush1.msra.mxu0 0.0
    %934 = vmatprep.subr.mxu0 0.0
    %935 = vmatpush1.msra.mxu0 0.0
    %936 = vmatprep.subr.mxu0 0.0
    %937 = vmatpush1.msra.mxu0 0.0
    %938 = vmatprep.subr.mxu0 0.0
    %939 = vmatpush1.msra.mxu0 0.0
    %940 = vmatprep.subr.mxu0 0.0
    %941 = vmatpush1.msra.mxu0 0.0
    %942 = vmatprep.subr.mxu0 0.0
    %943 = vmatpush1.msra.mxu0 0.0
    %944 = vmatprep.subr.mxu0 0.0
    %945 = vmatpush1.msra.mxu0 0.0
    %946 = vmatprep.subr.mxu0 0.0
    %947 = vmatpush1.msra.mxu0 0.0
    %948 = vmatprep.subr.mxu0 0.0
    %949 = vmatpush1.msra.mxu0 0.0
    %950 = vmatprep.subr.mxu0 0.0
    %951 = vmatpush1.msra.mxu0 0.0
    %952 = vmatprep.subr.mxu0 0.0
    %953 = vmatpush1.msra.mxu0 0.0
    %954 = vmatprep.subr.mxu0 0.0
    %955 = vmatpush1.msra.mxu0 0.0
    %956 = vmatprep.subr.mxu0 0.0
    %957 = vmatpush1.msra.mxu0 0.0
    %958 = vmatprep.subr.mxu0 0.0
    %959 = vmatpush1.msra.mxu0 0.0
    %960 = vmatprep.subr.mxu0 0.0
    %961 = vmatpush1.msra.mxu0 0.0
    %962 = vmatprep.subr.mxu0 0.0
    %963 = vmatpush1.msra.mxu0 0.0
    %964 = vmatprep.subr.mxu0 0.0
    %965 = vmatpush1.msra.mxu0 0.0
    %966 = vmatprep.subr.mxu0 0.0
    %967 = vmatpush1.msra.mxu0 0.0
    %968 = vmatprep.subr.mxu0 0.0
    %969 = vmatpush1.msra.mxu0 0.0
    %970 = vmatprep.subr.mxu0 0.0
    %971 = vmatpush1.msra.mxu0 0.0
    %972 = vmatprep.subr.mxu0 0.0
    %973 = vmatpush1.msra.mxu0 0.0
    %974 = vmatprep.subr.mxu0 0.0
    %975 = vmatpush1.msra.mxu0 0.0
    %976 = vmatprep.mubr.f32.mxu0 0.0
    %977 = vmatmul.mubr.f32.gmra.mrb[0].mxu0 %v734
    %v978 = vpop.f32.mrb[0].mxu0
    %v979 = vadd.f32 0.0, %v978
    %v980 = vpop.f32.mrb[0].mxu0
    %981 = vdwg.mxu0
    %v982 = vadd.f32 %v911, %v979
    %v983 = vxor.u32 %v982, 2147483648
    %v984 = vmul.f32 %v983, 1.442695
    %v985 = vpow.pop %v984
    %v986 = vadd.f32 %v985, 1.0
    %v987 = vrcp.pop %v986
    %v988 = vmul.f32 1.0, %v987
    %v989 = vtanh.pop %v982
    %v990 = vmul.f32 %v988, %v724
    %992 = vrot.lane.b32.xlu0 %v989, 64
    %v993 = vpop.permute.xlu0 %992
    %v995 = vmul.f32 %v988, %v993
    %997 = vrot.lane.b32.xlu0 %v995, 32
    %v998 = vpop.permute.xlu0 %997
    %v1000 = vadd.f32 %v990, %v998
    %v1001 = vtanh.pop %v1000
    %1003 = vrot.lane.b32.xlu0 %v1001, 64
    %v1004 = vpop.permute.xlu0 %1003
    %v1006 = vmul.f32 %v988, %v1004
    %1008 = vrot.lane.b32.xlu0 %v1006, 32
    %v1009 = vpop.permute.xlu0 %1008
    %v1010 = vsel %vm85, %v1009, 0
    %1012 = vmatprep.subr.mxu0 0.0
    %1013 = vmatpush1.msra.mxu0 %v46
    %1014 = vmatprep.subr.mxu0 0.0
    %1015 = vmatpush1.msra.mxu0 %v47
    %1016 = vmatprep.subr.mxu0 0.0
    %1017 = vmatpush1.msra.mxu0 %v48
    %1018 = vmatprep.subr.mxu0 0.0
    %1019 = vmatpush1.msra.mxu0 %v49
    %1020 = vmatprep.subr.mxu0 0.0
    %1021 = vmatpush1.msra.mxu0 0.0
    %1022 = vmatprep.subr.mxu0 0.0
    %1023 = vmatpush1.msra.mxu0 0.0
    %1024 = vmatprep.subr.mxu0 0.0
    %1025 = vmatpush1.msra.mxu0 0.0
    %1026 = vmatprep.subr.mxu0 0.0
    %1027 = vmatpush1.msra.mxu0 0.0
    %1028 = vmatprep.subr.mxu0 0.0
    %1029 = vmatpush1.msra.mxu0 0.0
    %1030 = vmatprep.subr.mxu0 0.0
    %1031 = vmatpush1.msra.mxu0 0.0
    %1032 = vmatprep.subr.mxu0 0.0
    %1033 = vmatpush1.msra.mxu0 0.0
    %1034 = vmatprep.subr.mxu0 0.0
    %1035 = vmatpush1.msra.mxu0 0.0
    %1036 = vmatprep.subr.mxu0 0.0
    %1037 = vmatpush1.msra.mxu0 0.0
    %1038 = vmatprep.subr.mxu0 0.0
    %1039 = vmatpush1.msra.mxu0 0.0
    %1040 = vmatprep.subr.mxu0 0.0
    %1041 = vmatpush1.msra.mxu0 0.0
    %1042 = vmatprep.subr.mxu0 0.0
    %1043 = vmatpush1.msra.mxu0 0.0
    %1044 = vmatprep.subr.mxu0 0.0
    %1045 = vmatpush1.msra.mxu0 0.0
    %1046 = vmatprep.subr.mxu0 0.0
    %1047 = vmatpush1.msra.mxu0 0.0
    %1048 = vmatprep.subr.mxu0 0.0
    %1049 = vmatpush1.msra.mxu0 0.0
    %1050 = vmatprep.subr.mxu0 0.0
    %1051 = vmatpush1.msra.mxu0 0.0
    %1052 = vmatprep.subr.mxu0 0.0
    %1053 = vmatpush1.msra.mxu0 0.0
    %1054 = vmatprep.subr.mxu0 0.0
    %1055 = vmatpush1.msra.mxu0 0.0
    %1056 = vmatprep.subr.mxu0 0.0
    %1057 = vmatpush1.msra.mxu0 0.0
    %1058 = vmatprep.subr.mxu0 0.0
    %1059 = vmatpush1.msra.mxu0 0.0
    %1060 = vmatprep.subr.mxu0 0.0
    %1061 = vmatpush1.msra.mxu0 0.0
    %1062 = vmatprep.subr.mxu0 0.0
    %1063 = vmatpush1.msra.mxu0 0.0
    %1064 = vmatprep.subr.mxu0 0.0
    %1065 = vmatpush1.msra.mxu0 0.0
    %1066 = vmatprep.subr.mxu0 0.0
    %1067 = vmatpush1.msra.mxu0 0.0
    %1068 = vmatprep.subr.mxu0 0.0
    %1069 = vmatpush1.msra.mxu0 0.0
    %1070 = vmatprep.subr.mxu0 0.0
    %1071 = vmatpush1.msra.mxu0 0.0
    %1072 = vmatprep.subr.mxu0 0.0
    %1073 = vmatpush1.msra.mxu0 0.0
    %1074 = vmatprep.subr.mxu0 0.0
    %1075 = vmatpush1.msra.mxu0 0.0
    %1076 = vmatprep.mubr.f32.mxu0 0.0
    %1077 = vmatmul.mubr.f32.gmra.mrb[0].mxu0 %v1010
    %v1078 = vpop.f32.mrb[0].mxu0
    %v1079 = vadd.f32 0.0, %v1078
    %v1080 = vpop.f32.mrb[0].mxu0
    %1081 = vdwg.mxu0
    %1083 = vrot.lane.b32.xlu0 %v905, 32
    %v1084 = vpop.permute.xlu0 %1083
    %v1085 = vsel %vm85, %v1084, 0
    %1087 = vmatprep.subr.mxu0 0.0
    %1088 = vmatpush1.msra.mxu0 %v50
    %1089 = vmatprep.subr.mxu0 0.0
    %1090 = vmatpush1.msra.mxu0 %v51
    %1091 = vmatprep.subr.mxu0 0.0
    %1092 = vmatpush1.msra.mxu0 %v52
    %1093 = vmatprep.subr.mxu0 0.0
    %1094 = vmatpush1.msra.mxu0 %v53
    %1095 = vmatprep.subr.mxu0 0.0
    %1096 = vmatpush1.msra.mxu0 0.0
    %1097 = vmatprep.subr.mxu0 0.0
    %1098 = vmatpush1.msra.mxu0 0.0
    %1099 = vmatprep.subr.mxu0 0.0
    %1100 = vmatpush1.msra.mxu0 0.0
    %1101 = vmatprep.subr.mxu0 0.0
    %1102 = vmatpush1.msra.mxu0 0.0
    %1103 = vmatprep.subr.mxu0 0.0
    %1104 = vmatpush1.msra.mxu0 0.0
    %1105 = vmatprep.subr.mxu0 0.0
    %1106 = vmatpush1.msra.mxu0 0.0
    %1107 = vmatprep.subr.mxu0 0.0
    %1108 = vmatpush1.msra.mxu0 0.0
    %1109 = vmatprep.subr.mxu0 0.0
    %1110 = vmatpush1.msra.mxu0 0.0
    %1111 = vmatprep.subr.mxu0 0.0
    %1112 = vmatpush1.msra.mxu0 0.0
    %1113 = vmatprep.subr.mxu0 0.0
    %1114 = vmatpush1.msra.mxu0 0.0
    %1115 = vmatprep.subr.mxu0 0.0
    %1116 = vmatpush1.msra.mxu0 0.0
    %1117 = vmatprep.subr.mxu0 0.0
    %1118 = vmatpush1.msra.mxu0 0.0
    %1119 = vmatprep.subr.mxu0 0.0
    %1120 = vmatpush1.msra.mxu0 0.0
    %1121 = vmatprep.subr.mxu0 0.0
    %1122 = vmatpush1.msra.mxu0 0.0
    %1123 = vmatprep.subr.mxu0 0.0
    %1124 = vmatpush1.msra.mxu0 0.0
    %1125 = vmatprep.subr.mxu0 0.0
    %1126 = vmatpush1.msra.mxu0 0.0
    %1127 = vmatprep.subr.mxu0 0.0
    %1128 = vmatpush1.msra.mxu0 0.0
    %1129 = vmatprep.subr.mxu0 0.0
    %1130 = vmatpush1.msra.mxu0 0.0
    %1131 = vmatprep.subr.mxu0 0.0
    %1132 = vmatpush1.msra.mxu0 0.0
    %1133 = vmatprep.subr.mxu0 0.0
    %1134 = vmatpush1.msra.mxu0 0.0
    %1135 = vmatprep.subr.mxu0 0.0
    %1136 = vmatpush1.msra.mxu0 0.0
    %1137 = vmatprep.subr.mxu0 0.0
    %1138 = vmatpush1.msra.mxu0 0.0
    %1139 = vmatprep.subr.mxu0 0.0
    %1140 = vmatpush1.msra.mxu0 0.0
    %1141 = vmatprep.subr.mxu0 0.0
    %1142 = vmatpush1.msra.mxu0 0.0
    %1143 = vmatprep.subr.mxu0 0.0
    %1144 = vmatpush1.msra.mxu0 0.0
    %1145 = vmatprep.subr.mxu0 0.0
    %1146 = vmatpush1.msra.mxu0 0.0
    %1147 = vmatprep.subr.mxu0 0.0
    %1148 = vmatpush1.msra.mxu0 0.0
    %1149 = vmatprep.subr.mxu0 0.0
    %1150 = vmatpush1.msra.mxu0 0.0
    %1151 = vmatprep.mubr.f32.mxu0 0.0
    %1152 = vmatmul.mubr.f32.gmra.mrb[0].mxu0 %v1085
    %v1153 = vpop.f32.mrb[0].mxu0
    %v1154 = vadd.f32 %v1079, %v1153
    %v1155 = vpop.f32.mrb[0].mxu0
    %1156 = vdwg.mxu0
    %v1157 = vadd.f32 %v1154, %v72
    %v1158 = vxor.u32 %v1157, 2147483648
    %v1159 = vmul.f32 %v1158, 1.442695
    %v1160 = vpow.pop %v1159
    %v1161 = vadd.f32 %v1160, 1.0
    %v1162 = vrcp.pop %v1161
    %v1163 = vmul.f32 1.0, %v1162
    %v1164 = vtanh.pop %v1157
    %v1165 = vmul.f32 %v1163, %v899
    %1167 = vrot.lane.b32.xlu0 %v1164, 64
    %v1168 = vpop.permute.xlu0 %1167
    %v1170 = vmul.f32 %v1163, %v1168
    %1172 = vrot.lane.b32.xlu0 %v1170, 32
    %v1173 = vpop.permute.xlu0 %1172
    %v1175 = vadd.f32 %v1165, %v1173
    %v1176 = vtanh.pop %v1175
    %1178 = vrot.lane.b32.xlu0 %v1176, 64
    %v1179 = vpop.permute.xlu0 %1178
    %v1181 = vmul.f32 %v1163, %v1179
    %1182 = vset.pattern.permute.xlu0 4
    %1183 = vperm.xlu0 %1182, %v41
    %v1184 = vpop.permute.xlu0 %1183
    %v1186 = vmul.f32 %v1184, %v62
    %v1187 = vadd.f32 %v1186, %v67
    %1188 = vmatprep.subr.mxu0 0.0
    %1189 = vmatpush1.msra.mxu0 %v42
    %1190 = vmatprep.subr.mxu0 0.0
    %1191 = vmatpush1.msra.mxu0 %v43
    %1192 = vmatprep.subr.mxu0 0.0
    %1193 = vmatpush1.msra.mxu0 %v44
    %1194 = vmatprep.subr.mxu0 0.0
    %1195 = vmatpush1.msra.mxu0 %v45
    %1196 = vmatprep.subr.mxu0 0.0
    %1197 = vmatpush1.msra.mxu0 0.0
    %1198 = vmatprep.subr.mxu0 0.0
    %1199 = vmatpush1.msra.mxu0 0.0
    %1200 = vmatprep.subr.mxu0 0.0
    %1201 = vmatpush1.msra.mxu0 0.0
    %1202 = vmatprep.subr.mxu0 0.0
    %1203 = vmatpush1.msra.mxu0 0.0
    %1204 = vmatprep.subr.mxu0 0.0
    %1205 = vmatpush1.msra.mxu0 0.0
    %1206 = vmatprep.subr.mxu0 0.0
    %1207 = vmatpush1.msra.mxu0 0.0
    %1208 = vmatprep.subr.mxu0 0.0
    %1209 = vmatpush1.msra.mxu0 0.0
    %1210 = vmatprep.subr.mxu0 0.0
    %1211 = vmatpush1.msra.mxu0 0.0
    %1212 = vmatprep.subr.mxu0 0.0
    %1213 = vmatpush1.msra.mxu0 0.0
    %1214 = vmatprep.subr.mxu0 0.0
    %1215 = vmatpush1.msra.mxu0 0.0
    %1216 = vmatprep.subr.mxu0 0.0
    %1217 = vmatpush1.msra.mxu0 0.0
    %1218 = vmatprep.subr.mxu0 0.0
    %1219 = vmatpush1.msra.mxu0 0.0
    %1220 = vmatprep.subr.mxu0 0.0
    %1221 = vmatpush1.msra.mxu0 0.0
    %1222 = vmatprep.subr.mxu0 0.0
    %1223 = vmatpush1.msra.mxu0 0.0
    %1224 = vmatprep.subr.mxu0 0.0
    %1225 = vmatpush1.msra.mxu0 0.0
    %1226 = vmatprep.subr.mxu0 0.0
    %1227 = vmatpush1.msra.mxu0 0.0
    %1228 = vmatprep.subr.mxu0 0.0
    %1229 = vmatpush1.msra.mxu0 0.0
    %1230 = vmatprep.subr.mxu0 0.0
    %1231 = vmatpush1.msra.mxu0 0.0
    %1232 = vmatprep.subr.mxu0 0.0
    %1233 = vmatpush1.msra.mxu0 0.0
    %1234 = vmatprep.subr.mxu0 0.0
    %1235 = vmatpush1.msra.mxu0 0.0
    %1236 = vmatprep.subr.mxu0 0.0
    %1237 = vmatpush1.msra.mxu0 0.0
    %1238 = vmatprep.subr.mxu0 0.0
    %1239 = vmatpush1.msra.mxu0 0.0
    %1240 = vmatprep.subr.mxu0 0.0
    %1241 = vmatpush1.msra.mxu0 0.0
    %1242 = vmatprep.subr.mxu0 0.0
    %1243 = vmatpush1.msra.mxu0 0.0
    %1244 = vmatprep.subr.mxu0 0.0
    %1245 = vmatpush1.msra.mxu0 0.0
    %1246 = vmatprep.subr.mxu0 0.0
    %1247 = vmatpush1.msra.mxu0 0.0
    %1248 = vmatprep.subr.mxu0 0.0
    %1249 = vmatpush1.msra.mxu0 0.0
    %1250 = vmatprep.subr.mxu0 0.0
    %1251 = vmatpush1.msra.mxu0 0.0
    %1252 = vmatprep.mubr.f32.mxu0 0.0
    %1253 = vmatmul.mubr.f32.gmra.mrb[0].mxu0 %v1010
    %v1254 = vpop.f32.mrb[0].mxu0
    %v1255 = vadd.f32 0.0, %v1254
    %v1256 = vpop.f32.mrb[0].mxu0
    %1257 = vdwg.mxu0
    %v1258 = vadd.f32 %v1187, %v1255
    %v1259 = vxor.u32 %v1258, 2147483648
    %v1260 = vmul.f32 %v1259, 1.442695
    %v1261 = vpow.pop %v1260
    %v1262 = vadd.f32 %v1261, 1.0
    %v1263 = vrcp.pop %v1262
    %v1264 = vmul.f32 1.0, %v1263
    %v1265 = vtanh.pop %v1258
    %v1266 = vmul.f32 %v1264, %v1000
    %1268 = vrot.lane.b32.xlu0 %v1265, 64
    %v1269 = vpop.permute.xlu0 %1268
    %v1271 = vmul.f32 %v1264, %v1269
    %1273 = vrot.lane.b32.xlu0 %v1271, 32
    %v1274 = vpop.permute.xlu0 %1273
    %v1276 = vadd.f32 %v1266, %v1274
    %v1277 = vtanh.pop %v1276
    %1279 = vrot.lane.b32.xlu0 %v1277, 64
    %v1280 = vpop.permute.xlu0 %1279
    %v1282 = vmul.f32 %v1264, %v1280
    %1284 = vrot.lane.b32.xlu0 %v1282, 32
    %v1285 = vpop.permute.xlu0 %1284
    %v1286 = vsel %vm85, %v1285, 0
    %1288 = vmatprep.subr.mxu0 0.0
    %1289 = vmatpush1.msra.mxu0 %v46
    %1290 = vmatprep.subr.mxu0 0.0
    %1291 = vmatpush1.msra.mxu0 %v47
    %1292 = vmatprep.subr.mxu0 0.0
    %1293 = vmatpush1.msra.mxu0 %v48
    %1294 = vmatprep.subr.mxu0 0.0
    %1295 = vmatpush1.msra.mxu0 %v49
    %1296 = vmatprep.subr.mxu0 0.0
    %1297 = vmatpush1.msra.mxu0 0.0
    %1298 = vmatprep.subr.mxu0 0.0
    %1299 = vmatpush1.msra.mxu0 0.0
    %1300 = vmatprep.subr.mxu0 0.0
    %1301 = vmatpush1.msra.mxu0 0.0
    %1302 = vmatprep.subr.mxu0 0.0
    %1303 = vmatpush1.msra.mxu0 0.0
    %1304 = vmatprep.subr.mxu0 0.0
    %1305 = vmatpush1.msra.mxu0 0.0
    %1306 = vmatprep.subr.mxu0 0.0
    %1307 = vmatpush1.msra.mxu0 0.0
    %1308 = vmatprep.subr.mxu0 0.0
    %1309 = vmatpush1.msra.mxu0 0.0
    %1310 = vmatprep.subr.mxu0 0.0
    %1311 = vmatpush1.msra.mxu0 0.0
    %1312 = vmatprep.subr.mxu0 0.0
    %1313 = vmatpush1.msra.mxu0 0.0
    %1314 = vmatprep.subr.mxu0 0.0
    %1315 = vmatpush1.msra.mxu0 0.0
    %1316 = vmatprep.subr.mxu0 0.0
    %1317 = vmatpush1.msra.mxu0 0.0
    %1318 = vmatprep.subr.mxu0 0.0
    %1319 = vmatpush1.msra.mxu0 0.0
    %1320 = vmatprep.subr.mxu0 0.0
    %1321 = vmatpush1.msra.mxu0 0.0
    %1322 = vmatprep.subr.mxu0 0.0
    %1323 = vmatpush1.msra.mxu0 0.0
    %1324 = vmatprep.subr.mxu0 0.0
    %1325 = vmatpush1.msra.mxu0 0.0
    %1326 = vmatprep.subr.mxu0 0.0
    %1327 = vmatpush1.msra.mxu0 0.0
    %1328 = vmatprep.subr.mxu0 0.0
    %1329 = vmatpush1.msra.mxu0 0.0
    %1330 = vmatprep.subr.mxu0 0.0
    %1331 = vmatpush1.msra.mxu0 0.0
    %1332 = vmatprep.subr.mxu0 0.0
    %1333 = vmatpush1.msra.mxu0 0.0
    %1334 = vmatprep.subr.mxu0 0.0
    %1335 = vmatpush1.msra.mxu0 0.0
    %1336 = vmatprep.subr.mxu0 0.0
    %1337 = vmatpush1.msra.mxu0 0.0
    %1338 = vmatprep.subr.mxu0 0.0
    %1339 = vmatpush1.msra.mxu0 0.0
    %1340 = vmatprep.subr.mxu0 0.0
    %1341 = vmatpush1.msra.mxu0 0.0
    %1342 = vmatprep.subr.mxu0 0.0
    %1343 = vmatpush1.msra.mxu0 0.0
    %1344 = vmatprep.subr.mxu0 0.0
    %1345 = vmatpush1.msra.mxu0 0.0
    %1346 = vmatprep.subr.mxu0 0.0
    %1347 = vmatpush1.msra.mxu0 0.0
    %1348 = vmatprep.subr.mxu0 0.0
    %1349 = vmatpush1.msra.mxu0 0.0
    %1350 = vmatprep.subr.mxu0 0.0
    %1351 = vmatpush1.msra.mxu0 0.0
    %1352 = vmatprep.mubr.f32.mxu0 0.0
    %1353 = vmatmul.mubr.f32.gmra.mrb[0].mxu0 %v1286
    %v1354 = vpop.f32.mrb[0].mxu0
    %v1355 = vadd.f32 0.0, %v1354
    %v1356 = vpop.f32.mrb[0].mxu0
    %1357 = vdwg.mxu0
    %1359 = vrot.lane.b32.xlu0 %v1181, 32
    %v1360 = vpop.permute.xlu0 %1359
    %v1361 = vsel %vm85, %v1360, 0
    %1363 = vmatprep.subr.mxu0 0.0
    %1364 = vmatpush1.msra.mxu0 %v50
    %1365 = vmatprep.subr.mxu0 0.0
    %1366 = vmatpush1.msra.mxu0 %v51
    %1367 = vmatprep.subr.mxu0 0.0
    %1368 = vmatpush1.msra.mxu0 %v52
    %1369 = vmatprep.subr.mxu0 0.0
    %1370 = vmatpush1.msra.mxu0 %v53
    %1371 = vmatprep.subr.mxu0 0.0
    %1372 = vmatpush1.msra.mxu0 0.0
    %1373 = vmatprep.subr.mxu0 0.0
    %1374 = vmatpush1.msra.mxu0 0.0
    %1375 = vmatprep.subr.mxu0 0.0
    %1376 = vmatpush1.msra.mxu0 0.0
    %1377 = vmatprep.subr.mxu0 0.0
    %1378 = vmatpush1.msra.mxu0 0.0
    %1379 = vmatprep.subr.mxu0 0.0
    %1380 = vmatpush1.msra.mxu0 0.0
    %1381 = vmatprep.subr.mxu0 0.0
    %1382 = vmatpush1.msra.mxu0 0.0
    %1383 = vmatprep.subr.mxu0 0.0
    %1384 = vmatpush1.msra.mxu0 0.0
    %1385 = vmatprep.subr.mxu0 0.0
    %1386 = vmatpush1.msra.mxu0 0.0
    %1387 = vmatprep.subr.mxu0 0.0
    %1388 = vmatpush1.msra.mxu0 0.0
    %1389 = vmatprep.subr.mxu0 0.0
    %1390 = vmatpush1.msra.mxu0 0.0
    %1391 = vmatprep.subr.mxu0 0.0
    %1392 = vmatpush1.msra.mxu0 0.0
    %1393 = vmatprep.subr.mxu0 0.0
    %1394 = vmatpush1.msra.mxu0 0.0
    %1395 = vmatprep.subr.mxu0 0.0
    %1396 = vmatpush1.msra.mxu0 0.0
    %1397 = vmatprep.subr.mxu0 0.0
    %1398 = vmatpush1.msra.mxu0 0.0
    %1399 = vmatprep.subr.mxu0 0.0
    %1400 = vmatpush1.msra.mxu0 0.0
    %1401 = vmatprep.subr.mxu0 0.0
    %1402 = vmatpush1.msra.mxu0 0.0
    %1403 = vmatprep.subr.mxu0 0.0
    %1404 = vmatpush1.msra.mxu0 0.0
    %1405 = vmatprep.subr.mxu0 0.0
    %1406 = vmatpush1.msra.mxu0 0.0
    %1407 = vmatprep.subr.mxu0 0.0
    %1408 = vmatpush1.msra.mxu0 0.0
    %1409 = vmatprep.subr.mxu0 0.0
    %1410 = vmatpush1.msra.mxu0 0.0
    %1411 = vmatprep.subr.mxu0 0.0
    %1412 = vmatpush1.msra.mxu0 0.0
    %1413 = vmatprep.subr.mxu0 0.0
    %1414 = vmatpush1.msra.mxu0 0.0
    %1415 = vmatprep.subr.mxu0 0.0
    %1416 = vmatpush1.msra.mxu0 0.0
    %1417 = vmatprep.subr.mxu0 0.0
    %1418 = vmatpush1.msra.mxu0 0.0
    %1419 = vmatprep.subr.mxu0 0.0
    %1420 = vmatpush1.msra.mxu0 0.0
    %1421 = vmatprep.subr.mxu0 0.0
    %1422 = vmatpush1.msra.mxu0 0.0
    %1423 = vmatprep.subr.mxu0 0.0
    %1424 = vmatpush1.msra.mxu0 0.0
    %1425 = vmatprep.subr.mxu0 0.0
    %1426 = vmatpush1.msra.mxu0 0.0
    %1427 = vmatprep.mubr.f32.mxu0 0.0
    %1428 = vmatmul.mubr.f32.gmra.mrb[0].mxu0 %v1361
    %v1429 = vpop.f32.mrb[0].mxu0
    %v1430 = vadd.f32 %v1355, %v1429
    %v1431 = vpop.f32.mrb[0].mxu0
    %1432 = vdwg.mxu0
    %v1433 = vadd.f32 %v1430, %v72
    %v1434 = vxor.u32 %v1433, 2147483648
    %v1435 = vmul.f32 %v1434, 1.442695
    %v1436 = vpow.pop %v1435
    %v1437 = vadd.f32 %v1436, 1.0
    %v1438 = vrcp.pop %v1437
    %v1439 = vmul.f32 1.0, %v1438
    %v1440 = vtanh.pop %v1433
    %v1441 = vmul.f32 %v1439, %v1175
    %1443 = vrot.lane.b32.xlu0 %v1440, 64
    %v1444 = vpop.permute.xlu0 %1443
    %v1446 = vmul.f32 %v1439, %v1444
    %1448 = vrot.lane.b32.xlu0 %v1446, 32
    %v1449 = vpop.permute.xlu0 %1448
    %v1451 = vadd.f32 %v1441, %v1449
    %v1452 = vtanh.pop %v1451
    %1454 = vrot.lane.b32.xlu0 %v1452, 64
    %v1455 = vpop.permute.xlu0 %1454
    %v1457 = vmul.f32 %v1439, %v1455
    %1458 = vset.pattern.permute.xlu0 5
    %1459 = vperm.xlu0 %1458, %v41
    %v1460 = vpop.permute.xlu0 %1459
    %v1462 = vmul.f32 %v1460, %v62
    %v1463 = vadd.f32 %v1462, %v67
    %1464 = vmatprep.subr.mxu0 0.0
    %1465 = vmatpush1.msra.mxu0 %v42
    %1466 = vmatprep.subr.mxu0 0.0
    %1467 = vmatpush1.msra.mxu0 %v43
    %1468 = vmatprep.subr.mxu0 0.0
    %1469 = vmatpush1.msra.mxu0 %v44
    %1470 = vmatprep.subr.mxu0 0.0
    %1471 = vmatpush1.msra.mxu0 %v45
    %1472 = vmatprep.subr.mxu0 0.0
    %1473 = vmatpush1.msra.mxu0 0.0
    %1474 = vmatprep.subr.mxu0 0.0
    %1475 = vmatpush1.msra.mxu0 0.0
    %1476 = vmatprep.subr.mxu0 0.0
    %1477 = vmatpush1.msra.mxu0 0.0
    %1478 = vmatprep.subr.mxu0 0.0
    %1479 = vmatpush1.msra.mxu0 0.0
    %1480 = vmatprep.subr.mxu0 0.0
    %1481 = vmatpush1.msra.mxu0 0.0
    %1482 = vmatprep.subr.mxu0 0.0
    %1483 = vmatpush1.msra.mxu0 0.0
    %1484 = vmatprep.subr.mxu0 0.0
    %1485 = vmatpush1.msra.mxu0 0.0
    %1486 = vmatprep.subr.mxu0 0.0
    %1487 = vmatpush1.msra.mxu0 0.0
    %1488 = vmatprep.subr.mxu0 0.0
    %1489 = vmatpush1.msra.mxu0 0.0
    %1490 = vmatprep.subr.mxu0 0.0
    %1491 = vmatpush1.msra.mxu0 0.0
    %1492 = vmatprep.subr.mxu0 0.0
    %1493 = vmatpush1.msra.mxu0 0.0
    %1494 = vmatprep.subr.mxu0 0.0
    %1495 = vmatpush1.msra.mxu0 0.0
    %1496 = vmatprep.subr.mxu0 0.0
    %1497 = vmatpush1.msra.mxu0 0.0
    %1498 = vmatprep.subr.mxu0 0.0
    %1499 = vmatpush1.msra.mxu0 0.0
    %1500 = vmatprep.subr.mxu0 0.0
    %1501 = vmatpush1.msra.mxu0 0.0
    %1502 = vmatprep.subr.mxu0 0.0
    %1503 = vmatpush1.msra.mxu0 0.0
    %1504 = vmatprep.subr.mxu0 0.0
    %1505 = vmatpush1.msra.mxu0 0.0
    %1506 = vmatprep.subr.mxu0 0.0
    %1507 = vmatpush1.msra.mxu0 0.0
    %1508 = vmatprep.subr.mxu0 0.0
    %1509 = vmatpush1.msra.mxu0 0.0
    %1510 = vmatprep.subr.mxu0 0.0
    %1511 = vmatpush1.msra.mxu0 0.0
    %1512 = vmatprep.subr.mxu0 0.0
    %1513 = vmatpush1.msra.mxu0 0.0
    %1514 = vmatprep.subr.mxu0 0.0
    %1515 = vmatpush1.msra.mxu0 0.0
    %1516 = vmatprep.subr.mxu0 0.0
    %1517 = vmatpush1.msra.mxu0 0.0
    %1518 = vmatprep.subr.mxu0 0.0
    %1519 = vmatpush1.msra.mxu0 0.0
    %1520 = vmatprep.subr.mxu0 0.0
    %1521 = vmatpush1.msra.mxu0 0.0
    %1522 = vmatprep.subr.mxu0 0.0
    %1523 = vmatpush1.msra.mxu0 0.0
    %1524 = vmatprep.subr.mxu0 0.0
    %1525 = vmatpush1.msra.mxu0 0.0
    %1526 = vmatprep.subr.mxu0 0.0
    %1527 = vmatpush1.msra.mxu0 0.0
    %1528 = vmatprep.mubr.f32.mxu0 0.0
    %1529 = vmatmul.mubr.f32.gmra.mrb[0].mxu0 %v1286
    %v1530 = vpop.f32.mrb[0].mxu0
    %v1531 = vadd.f32 0.0, %v1530
    %v1532 = vpop.f32.mrb[0].mxu0
    %1533 = vdwg.mxu0
    %v1534 = vadd.f32 %v1463, %v1531
    %v1535 = vxor.u32 %v1534, 2147483648
    %v1536 = vmul.f32 %v1535, 1.442695
    %v1537 = vpow.pop %v1536
    %v1538 = vadd.f32 %v1537, 1.0
    %v1539 = vrcp.pop %v1538
    %v1540 = vmul.f32 1.0, %v1539
    %v1541 = vtanh.pop %v1534
    %v1542 = vmul.f32 %v1540, %v1276
    %1544 = vrot.lane.b32.xlu0 %v1541, 64
    %v1545 = vpop.permute.xlu0 %1544
    %v1547 = vmul.f32 %v1540, %v1545
    %1549 = vrot.lane.b32.xlu0 %v1547, 32
    %v1550 = vpop.permute.xlu0 %1549
    %v1552 = vadd.f32 %v1542, %v1550
    %v1553 = vtanh.pop %v1552
    %1555 = vrot.lane.b32.xlu0 %v1553, 64
    %v1556 = vpop.permute.xlu0 %1555
    %v1558 = vmul.f32 %v1540, %v1556
    %1560 = vrot.lane.b32.xlu0 %v1558, 32
    %v1561 = vpop.permute.xlu0 %1560
    %v1562 = vsel %vm85, %v1561, 0
    %1564 = vmatprep.subr.mxu0 0.0
    %1565 = vmatpush1.msra.mxu0 %v46
    %1566 = vmatprep.subr.mxu0 0.0
    %1567 = vmatpush1.msra.mxu0 %v47
    %1568 = vmatprep.subr.mxu0 0.0
    %1569 = vmatpush1.msra.mxu0 %v48
    %1570 = vmatprep.subr.mxu0 0.0
    %1571 = vmatpush1.msra.mxu0 %v49
    %1572 = vmatprep.subr.mxu0 0.0
    %1573 = vmatpush1.msra.mxu0 0.0
    %1574 = vmatprep.subr.mxu0 0.0
    %1575 = vmatpush1.msra.mxu0 0.0
    %1576 = vmatprep.subr.mxu0 0.0
    %1577 = vmatpush1.msra.mxu0 0.0
    %1578 = vmatprep.subr.mxu0 0.0
    %1579 = vmatpush1.msra.mxu0 0.0
    %1580 = vmatprep.subr.mxu0 0.0
    %1581 = vmatpush1.msra.mxu0 0.0
    %1582 = vmatprep.subr.mxu0 0.0
    %1583 = vmatpush1.msra.mxu0 0.0
    %1584 = vmatprep.subr.mxu0 0.0
    %1585 = vmatpush1.msra.mxu0 0.0
    %1586 = vmatprep.subr.mxu0 0.0
    %1587 = vmatpush1.msra.mxu0 0.0
    %1588 = vmatprep.subr.mxu0 0.0
    %1589 = vmatpush1.msra.mxu0 0.0
    %1590 = vmatprep.subr.mxu0 0.0
    %1591 = vmatpush1.msra.mxu0 0.0
    %1592 = vmatprep.subr.mxu0 0.0
    %1593 = vmatpush1.msra.mxu0 0.0
    %1594 = vmatprep.subr.mxu0 0.0
    %1595 = vmatpush1.msra.mxu0 0.0
    %1596 = vmatprep.subr.mxu0 0.0
    %1597 = vmatpush1.msra.mxu0 0.0
    %1598 = vmatprep.subr.mxu0 0.0
    %1599 = vmatpush1.msra.mxu0 0.0
    %1600 = vmatprep.subr.mxu0 0.0
    %1601 = vmatpush1.msra.mxu0 0.0
    %1602 = vmatprep.subr.mxu0 0.0
    %1603 = vmatpush1.msra.mxu0 0.0
    %1604 = vmatprep.subr.mxu0 0.0
    %1605 = vmatpush1.msra.mxu0 0.0
    %1606 = vmatprep.subr.mxu0 0.0
    %1607 = vmatpush1.msra.mxu0 0.0
    %1608 = vmatprep.subr.mxu0 0.0
    %1609 = vmatpush1.msra.mxu0 0.0
    %1610 = vmatprep.subr.mxu0 0.0
    %1611 = vmatpush1.msra.mxu0 0.0
    %1612 = vmatprep.subr.mxu0 0.0
    %1613 = vmatpush1.msra.mxu0 0.0
    %1614 = vmatprep.subr.mxu0 0.0
    %1615 = vmatpush1.msra.mxu0 0.0
    %1616 = vmatprep.subr.mxu0 0.0
    %1617 = vmatpush1.msra.mxu0 0.0
    %1618 = vmatprep.subr.mxu0 0.0
    %1619 = vmatpush1.msra.mxu0 0.0
    %1620 = vmatprep.subr.mxu0 0.0
    %1621 = vmatpush1.msra.mxu0 0.0
    %1622 = vmatprep.subr.mxu0 0.0
    %1623 = vmatpush1.msra.mxu0 0.0
    %1624 = vmatprep.subr.mxu0 0.0
    %1625 = vmatpush1.msra.mxu0 0.0
    %1626 = vmatprep.subr.mxu0 0.0
    %1627 = vmatpush1.msra.mxu0 0.0
    %1628 = vmatprep.mubr.f32.mxu0 0.0
    %1629 = vmatmul.mubr.f32.gmra.mrb[0].mxu0 %v1562
    %v1630 = vpop.f32.mrb[0].mxu0
    %v1631 = vadd.f32 0.0, %v1630
    %v1632 = vpop.f32.mrb[0].mxu0
    %1633 = vdwg.mxu0
    %1635 = vrot.lane.b32.xlu0 %v1457, 32
    %v1636 = vpop.permute.xlu0 %1635
    %v1637 = vsel %vm85, %v1636, 0
    %1639 = vmatprep.subr.mxu0 0.0
    %1640 = vmatpush1.msra.mxu0 %v50
    %1641 = vmatprep.subr.mxu0 0.0
    %1642 = vmatpush1.msra.mxu0 %v51
    %1643 = vmatprep.subr.mxu0 0.0
    %1644 = vmatpush1.msra.mxu0 %v52
    %1645 = vmatprep.subr.mxu0 0.0
    %1646 = vmatpush1.msra.mxu0 %v53
    %1647 = vmatprep.subr.mxu0 0.0
    %1648 = vmatpush1.msra.mxu0 0.0
    %1649 = vmatprep.subr.mxu0 0.0
    %1650 = vmatpush1.msra.mxu0 0.0
    %1651 = vmatprep.subr.mxu0 0.0
    %1652 = vmatpush1.msra.mxu0 0.0
    %1653 = vmatprep.subr.mxu0 0.0
    %1654 = vmatpush1.msra.mxu0 0.0
    %1655 = vmatprep.subr.mxu0 0.0
    %1656 = vmatpush1.msra.mxu0 0.0
    %1657 = vmatprep.subr.mxu0 0.0
    %1658 = vmatpush1.msra.mxu0 0.0
    %1659 = vmatprep.subr.mxu0 0.0
    %1660 = vmatpush1.msra.mxu0 0.0
    %1661 = vmatprep.subr.mxu0 0.0
    %1662 = vmatpush1.msra.mxu0 0.0
    %1663 = vmatprep.subr.mxu0 0.0
    %1664 = vmatpush1.msra.mxu0 0.0
    %1665 = vmatprep.subr.mxu0 0.0
    %1666 = vmatpush1.msra.mxu0 0.0
    %1667 = vmatprep.subr.mxu0 0.0
    %1668 = vmatpush1.msra.mxu0 0.0
    %1669 = vmatprep.subr.mxu0 0.0
    %1670 = vmatpush1.msra.mxu0 0.0
    %1671 = vmatprep.subr.mxu0 0.0
    %1672 = vmatpush1.msra.mxu0 0.0
    %1673 = vmatprep.subr.mxu0 0.0
    %1674 = vmatpush1.msra.mxu0 0.0
    %1675 = vmatprep.subr.mxu0 0.0
    %1676 = vmatpush1.msra.mxu0 0.0
    %1677 = vmatprep.subr.mxu0 0.0
    %1678 = vmatpush1.msra.mxu0 0.0
    %1679 = vmatprep.subr.mxu0 0.0
    %1680 = vmatpush1.msra.mxu0 0.0
    %1681 = vmatprep.subr.mxu0 0.0
    %1682 = vmatpush1.msra.mxu0 0.0
    %1683 = vmatprep.subr.mxu0 0.0
    %1684 = vmatpush1.msra.mxu0 0.0
    %1685 = vmatprep.subr.mxu0 0.0
    %1686 = vmatpush1.msra.mxu0 0.0
    %1687 = vmatprep.subr.mxu0 0.0
    %1688 = vmatpush1.msra.mxu0 0.0
    %1689 = vmatprep.subr.mxu0 0.0
    %1690 = vmatpush1.msra.mxu0 0.0
    %1691 = vmatprep.subr.mxu0 0.0
    %1692 = vmatpush1.msra.mxu0 0.0
    %1693 = vmatprep.subr.mxu0 0.0
    %1694 = vmatpush1.msra.mxu0 0.0
    %1695 = vmatprep.subr.mxu0 0.0
    %1696 = vmatpush1.msra.mxu0 0.0
    %1697 = vmatprep.subr.mxu0 0.0
    %1698 = vmatpush1.msra.mxu0 0.0
    %1699 = vmatprep.subr.mxu0 0.0
    %1700 = vmatpush1.msra.mxu0 0.0
    %1701 = vmatprep.subr.mxu0 0.0
    %1702 = vmatpush1.msra.mxu0 0.0
    %1703 = vmatprep.mubr.f32.mxu0 0.0
    %1704 = vmatmul.mubr.f32.gmra.mrb[0].mxu0 %v1637
    %v1705 = vpop.f32.mrb[0].mxu0
    %v1706 = vadd.f32 %v1631, %v1705
    %v1707 = vpop.f32.mrb[0].mxu0
    %1708 = vdwg.mxu0
    %v1709 = vadd.f32 %v1706, %v72
    %v1710 = vxor.u32 %v1709, 2147483648
    %v1711 = vmul.f32 %v1710, 1.442695
    %v1712 = vpow.pop %v1711
    %v1713 = vadd.f32 %v1712, 1.0
    %v1714 = vrcp.pop %v1713
    %v1715 = vmul.f32 1.0, %v1714
    %v1716 = vtanh.pop %v1709
    %v1717 = vmul.f32 %v1715, %v1451
    %1719 = vrot.lane.b32.xlu0 %v1716, 64
    %v1720 = vpop.permute.xlu0 %1719
    %v1722 = vmul.f32 %v1715, %v1720
    %1724 = vrot.lane.b32.xlu0 %v1722, 32
    %v1725 = vpop.permute.xlu0 %1724
    %v1727 = vadd.f32 %v1717, %v1725
    %v1728 = vtanh.pop %v1727
    %1730 = vrot.lane.b32.xlu0 %v1728, 64
    %v1731 = vpop.permute.xlu0 %1730
    %v1733 = vmul.f32 %v1715, %v1731
    %1734 = vset.pattern.permute.xlu0 6
    %1735 = vperm.xlu0 %1734, %v41
    %v1736 = vpop.permute.xlu0 %1735
    %v1738 = vmul.f32 %v1736, %v62
    %v1739 = vadd.f32 %v1738, %v67
    %1740 = vmatprep.subr.mxu0 0.0
    %1741 = vmatpush1.msra.mxu0 %v42
    %1742 = vmatprep.subr.mxu0 0.0
    %1743 = vmatpush1.msra.mxu0 %v43
    %1744 = vmatprep.subr.mxu0 0.0
    %1745 = vmatpush1.msra.mxu0 %v44
    %1746 = vmatprep.subr.mxu0 0.0
    %1747 = vmatpush1.msra.mxu0 %v45
    %1748 = vmatprep.subr.mxu0 0.0
    %1749 = vmatpush1.msra.mxu0 0.0
    %1750 = vmatprep.subr.mxu0 0.0
    %1751 = vmatpush1.msra.mxu0 0.0
    %1752 = vmatprep.subr.mxu0 0.0
    %1753 = vmatpush1.msra.mxu0 0.0
    %1754 = vmatprep.subr.mxu0 0.0
    %1755 = vmatpush1.msra.mxu0 0.0
    %1756 = vmatprep.subr.mxu0 0.0
    %1757 = vmatpush1.msra.mxu0 0.0
    %1758 = vmatprep.subr.mxu0 0.0
    %1759 = vmatpush1.msra.mxu0 0.0
    %1760 = vmatprep.subr.mxu0 0.0
    %1761 = vmatpush1.msra.mxu0 0.0
    %1762 = vmatprep.subr.mxu0 0.0
    %1763 = vmatpush1.msra.mxu0 0.0
    %1764 = vmatprep.subr.mxu0 0.0
    %1765 = vmatpush1.msra.mxu0 0.0
    %1766 = vmatprep.subr.mxu0 0.0
    %1767 = vmatpush1.msra.mxu0 0.0
    %1768 = vmatprep.subr.mxu0 0.0
    %1769 = vmatpush1.msra.mxu0 0.0
    %1770 = vmatprep.subr.mxu0 0.0
    %1771 = vmatpush1.msra.mxu0 0.0
    %1772 = vmatprep.subr.mxu0 0.0
    %1773 = vmatpush1.msra.mxu0 0.0
    %1774 = vmatprep.subr.mxu0 0.0
    %1775 = vmatpush1.msra.mxu0 0.0
    %1776 = vmatprep.subr.mxu0 0.0
    %1777 = vmatpush1.msra.mxu0 0.0
    %1778 = vmatprep.subr.mxu0 0.0
    %1779 = vmatpush1.msra.mxu0 0.0
    %1780 = vmatprep.subr.mxu0 0.0
    %1781 = vmatpush1.msra.mxu0 0.0
    %1782 = vmatprep.subr.mxu0 0.0
    %1783 = vmatpush1.msra.mxu0 0.0
    %1784 = vmatprep.subr.mxu0 0.0
    %1785 = vmatpush1.msra.mxu0 0.0
    %1786 = vmatprep.subr.mxu0 0.0
    %1787 = vmatpush1.msra.mxu0 0.0
    %1788 = vmatprep.subr.mxu0 0.0
    %1789 = vmatpush1.msra.mxu0 0.0
    %1790 = vmatprep.subr.mxu0 0.0
    %1791 = vmatpush1.msra.mxu0 0.0
    %1792 = vmatprep.subr.mxu0 0.0
    %1793 = vmatpush1.msra.mxu0 0.0
    %1794 = vmatprep.subr.mxu0 0.0
    %1795 = vmatpush1.msra.mxu0 0.0
    %1796 = vmatprep.subr.mxu0 0.0
    %1797 = vmatpush1.msra.mxu0 0.0
    %1798 = vmatprep.subr.mxu0 0.0
    %1799 = vmatpush1.msra.mxu0 0.0
    %1800 = vmatprep.subr.mxu0 0.0
    %1801 = vmatpush1.msra.mxu0 0.0
    %1802 = vmatprep.subr.mxu0 0.0
    %1803 = vmatpush1.msra.mxu0 0.0
    %1804 = vmatprep.mubr.f32.mxu0 0.0
    %1805 = vmatmul.mubr.f32.gmra.mrb[0].mxu0 %v1562
    %v1806 = vpop.f32.mrb[0].mxu0
    %v1807 = vadd.f32 0.0, %v1806
    %v1808 = vpop.f32.mrb[0].mxu0
    %1809 = vdwg.mxu0
    %v1810 = vadd.f32 %v1739, %v1807
    %v1811 = vxor.u32 %v1810, 2147483648
    %v1812 = vmul.f32 %v1811, 1.442695
    %v1813 = vpow.pop %v1812
    %v1814 = vadd.f32 %v1813, 1.0
    %v1815 = vrcp.pop %v1814
    %v1816 = vmul.f32 1.0, %v1815
    %v1817 = vtanh.pop %v1810
    %v1818 = vmul.f32 %v1816, %v1552
    %1820 = vrot.lane.b32.xlu0 %v1817, 64
    %v1821 = vpop.permute.xlu0 %1820
    %v1823 = vmul.f32 %v1816, %v1821
    %1825 = vrot.lane.b32.xlu0 %v1823, 32
    %v1826 = vpop.permute.xlu0 %1825
    %v1828 = vadd.f32 %v1818, %v1826
    %v1829 = vtanh.pop %v1828
    %1831 = vrot.lane.b32.xlu0 %v1829, 64
    %v1832 = vpop.permute.xlu0 %1831
    %v1834 = vmul.f32 %v1816, %v1832
    %1836 = vrot.lane.b32.xlu0 %v1834, 32
    %v1837 = vpop.permute.xlu0 %1836
    %v1838 = vsel %vm85, %v1837, 0
    %1840 = vmatprep.subr.mxu0 0.0
    %1841 = vmatpush1.msra.mxu0 %v46
    %1842 = vmatprep.subr.mxu0 0.0
    %1843 = vmatpush1.msra.mxu0 %v47
    %1844 = vmatprep.subr.mxu0 0.0
    %1845 = vmatpush1.msra.mxu0 %v48
    %1846 = vmatprep.subr.mxu0 0.0
    %1847 = vmatpush1.msra.mxu0 %v49
    %1848 = vmatprep.subr.mxu0 0.0
    %1849 = vmatpush1.msra.mxu0 0.0
    %1850 = vmatprep.subr.mxu0 0.0
    %1851 = vmatpush1.msra.mxu0 0.0
    %1852 = vmatprep.subr.mxu0 0.0
    %1853 = vmatpush1.msra.mxu0 0.0
    %1854 = vmatprep.subr.mxu0 0.0
    %1855 = vmatpush1.msra.mxu0 0.0
    %1856 = vmatprep.subr.mxu0 0.0
    %1857 = vmatpush1.msra.mxu0 0.0
    %1858 = vmatprep.subr.mxu0 0.0
    %1859 = vmatpush1.msra.mxu0 0.0
    %1860 = vmatprep.subr.mxu0 0.0
    %1861 = vmatpush1.msra.mxu0 0.0
    %1862 = vmatprep.subr.mxu0 0.0
    %1863 = vmatpush1.msra.mxu0 0.0
    %1864 = vmatprep.subr.mxu0 0.0
    %1865 = vmatpush1.msra.mxu0 0.0
    %1866 = vmatprep.subr.mxu0 0.0
    %1867 = vmatpush1.msra.mxu0 0.0
    %1868 = vmatprep.subr.mxu0 0.0
    %1869 = vmatpush1.msra.mxu0 0.0
    %1870 = vmatprep.subr.mxu0 0.0
    %1871 = vmatpush1.msra.mxu0 0.0
    %1872 = vmatprep.subr.mxu0 0.0
    %1873 = vmatpush1.msra.mxu0 0.0
    %1874 = vmatprep.subr.mxu0 0.0
    %1875 = vmatpush1.msra.mxu0 0.0
    %1876 = vmatprep.subr.mxu0 0.0
    %1877 = vmatpush1.msra.mxu0 0.0
    %1878 = vmatprep.subr.mxu0 0.0
    %1879 = vmatpush1.msra.mxu0 0.0
    %1880 = vmatprep.subr.mxu0 0.0
    %1881 = vmatpush1.msra.mxu0 0.0
    %1882 = vmatprep.subr.mxu0 0.0
    %1883 = vmatpush1.msra.mxu0 0.0
    %1884 = vmatprep.subr.mxu0 0.0
    %1885 = vmatpush1.msra.mxu0 0.0
    %1886 = vmatprep.subr.mxu0 0.0
    %1887 = vmatpush1.msra.mxu0 0.0
    %1888 = vmatprep.subr.mxu0 0.0
    %1889 = vmatpush1.msra.mxu0 0.0
    %1890 = vmatprep.subr.mxu0 0.0
    %1891 = vmatpush1.msra.mxu0 0.0
    %1892 = vmatprep.subr.mxu0 0.0
    %1893 = vmatpush1.msra.mxu0 0.0
    %1894 = vmatprep.subr.mxu0 0.0
    %1895 = vmatpush1.msra.mxu0 0.0
    %1896 = vmatprep.subr.mxu0 0.0
    %1897 = vmatpush1.msra.mxu0 0.0
    %1898 = vmatprep.subr.mxu0 0.0
    %1899 = vmatpush1.msra.mxu0 0.0
    %1900 = vmatprep.subr.mxu0 0.0
    %1901 = vmatpush1.msra.mxu0 0.0
    %1902 = vmatprep.subr.mxu0 0.0
    %1903 = vmatpush1.msra.mxu0 0.0
    %1904 = vmatprep.mubr.f32.mxu0 0.0
    %1905 = vmatmul.mubr.f32.gmra.mrb[0].mxu0 %v1838
    %v1906 = vpop.f32.mrb[0].mxu0
    %v1907 = vadd.f32 0.0, %v1906
    %v1908 = vpop.f32.mrb[0].mxu0
    %1909 = vdwg.mxu0
    %1911 = vrot.lane.b32.xlu0 %v1733, 32
    %v1912 = vpop.permute.xlu0 %1911
    %v1913 = vsel %vm85, %v1912, 0
    %1915 = vmatprep.subr.mxu0 0.0
    %1916 = vmatpush1.msra.mxu0 %v50
    %1917 = vmatprep.subr.mxu0 0.0
    %1918 = vmatpush1.msra.mxu0 %v51
    %1919 = vmatprep.subr.mxu0 0.0
    %1920 = vmatpush1.msra.mxu0 %v52
    %1921 = vmatprep.subr.mxu0 0.0
    %1922 = vmatpush1.msra.mxu0 %v53
    %1923 = vmatprep.subr.mxu0 0.0
    %1924 = vmatpush1.msra.mxu0 0.0
    %1925 = vmatprep.subr.mxu0 0.0
    %1926 = vmatpush1.msra.mxu0 0.0
    %1927 = vmatprep.subr.mxu0 0.0
    %1928 = vmatpush1.msra.mxu0 0.0
    %1929 = vmatprep.subr.mxu0 0.0
    %1930 = vmatpush1.msra.mxu0 0.0
    %1931 = vmatprep.subr.mxu0 0.0
    %1932 = vmatpush1.msra.mxu0 0.0
    %1933 = vmatprep.subr.mxu0 0.0
    %1934 = vmatpush1.msra.mxu0 0.0
    %1935 = vmatprep.subr.mxu0 0.0
    %1936 = vmatpush1.msra.mxu0 0.0
    %1937 = vmatprep.subr.mxu0 0.0
    %1938 = vmatpush1.msra.mxu0 0.0
    %1939 = vmatprep.subr.mxu0 0.0
    %1940 = vmatpush1.msra.mxu0 0.0
    %1941 = vmatprep.subr.mxu0 0.0
    %1942 = vmatpush1.msra.mxu0 0.0
    %1943 = vmatprep.subr.mxu0 0.0
    %1944 = vmatpush1.msra.mxu0 0.0
    %1945 = vmatprep.subr.mxu0 0.0
    %1946 = vmatpush1.msra.mxu0 0.0
    %1947 = vmatprep.subr.mxu0 0.0
    %1948 = vmatpush1.msra.mxu0 0.0
    %1949 = vmatprep.subr.mxu0 0.0
    %1950 = vmatpush1.msra.mxu0 0.0
    %1951 = vmatprep.subr.mxu0 0.0
    %1952 = vmatpush1.msra.mxu0 0.0
    %1953 = vmatprep.subr.mxu0 0.0
    %1954 = vmatpush1.msra.mxu0 0.0
    %1955 = vmatprep.subr.mxu0 0.0
    %1956 = vmatpush1.msra.mxu0 0.0
    %1957 = vmatprep.subr.mxu0 0.0
    %1958 = vmatpush1.msra.mxu0 0.0
    %1959 = vmatprep.subr.mxu0 0.0
    %1960 = vmatpush1.msra.mxu0 0.0
    %1961 = vmatprep.subr.mxu0 0.0
    %1962 = vmatpush1.msra.mxu0 0.0
    %1963 = vmatprep.subr.mxu0 0.0
    %1964 = vmatpush1.msra.mxu0 0.0
    %1965 = vmatprep.subr.mxu0 0.0
    %1966 = vmatpush1.msra.mxu0 0.0
    %1967 = vmatprep.subr.mxu0 0.0
    %1968 = vmatpush1.msra.mxu0 0.0
    %1969 = vmatprep.subr.mxu0 0.0
    %1970 = vmatpush1.msra.mxu0 0.0
    %1971 = vmatprep.subr.mxu0 0.0
    %1972 = vmatpush1.msra.mxu0 0.0
    %1973 = vmatprep.subr.mxu0 0.0
    %1974 = vmatpush1.msra.mxu0 0.0
    %1975 = vmatprep.subr.mxu0 0.0
    %1976 = vmatpush1.msra.mxu0 0.0
    %1977 = vmatprep.subr.mxu0 0.0
    %1978 = vmatpush1.msra.mxu0 0.0
    %1979 = vmatprep.mubr.f32.mxu0 0.0
    %1980 = vmatmul.mubr.f32.gmra.mrb[0].mxu0 %v1913
    %v1981 = vpop.f32.mrb[0].mxu0
    %v1982 = vadd.f32 %v1907, %v1981
    %v1983 = vpop.f32.mrb[0].mxu0
    %1984 = vdwg.mxu0
    %v1985 = vadd.f32 %v1982, %v72
    %v1986 = vxor.u32 %v1985, 2147483648
    %v1987 = vmul.f32 %v1986, 1.442695
    %v1988 = vpow.pop %v1987
    %v1989 = vadd.f32 %v1988, 1.0
    %v1990 = vrcp.pop %v1989
    %v1991 = vmul.f32 1.0, %v1990
    %v1992 = vtanh.pop %v1985
    %v1993 = vmul.f32 %v1991, %v1727
    %1995 = vrot.lane.b32.xlu0 %v1992, 64
    %v1996 = vpop.permute.xlu0 %1995
    %v1998 = vmul.f32 %v1991, %v1996
    %2000 = vrot.lane.b32.xlu0 %v1998, 32
    %v2001 = vpop.permute.xlu0 %2000
    %v2003 = vadd.f32 %v1993, %v2001
    %v2004 = vtanh.pop %v2003
    %2006 = vrot.lane.b32.xlu0 %v2004, 64
    %v2007 = vpop.permute.xlu0 %2006
    %v2009 = vmul.f32 %v1991, %v2007
    %2010 = vset.pattern.permute.xlu0 7
    %2011 = vperm.xlu0 %2010, %v41
    %v2012 = vpop.permute.xlu0 %2011
    %v2014 = vmul.f32 %v2012, %v62
    %v2015 = vadd.f32 %v2014, %v67
    %2016 = vmatprep.subr.mxu0 0.0
    %2017 = vmatpush1.msra.mxu0 %v42
    %2018 = vmatprep.subr.mxu0 0.0
    %2019 = vmatpush1.msra.mxu0 %v43
    %2020 = vmatprep.subr.mxu0 0.0
    %2021 = vmatpush1.msra.mxu0 %v44
    %2022 = vmatprep.subr.mxu0 0.0
    %2023 = vmatpush1.msra.mxu0 %v45
    %2024 = vmatprep.subr.mxu0 0.0
    %2025 = vmatpush1.msra.mxu0 0.0
    %2026 = vmatprep.subr.mxu0 0.0
    %2027 = vmatpush1.msra.mxu0 0.0
    %2028 = vmatprep.subr.mxu0 0.0
    %2029 = vmatpush1.msra.mxu0 0.0
    %2030 = vmatprep.subr.mxu0 0.0
    %2031 = vmatpush1.msra.mxu0 0.0
    %2032 = vmatprep.subr.mxu0 0.0
    %2033 = vmatpush1.msra.mxu0 0.0
    %2034 = vmatprep.subr.mxu0 0.0
    %2035 = vmatpush1.msra.mxu0 0.0
    %2036 = vmatprep.subr.mxu0 0.0
    %2037 = vmatpush1.msra.mxu0 0.0
    %2038 = vmatprep.subr.mxu0 0.0
    %2039 = vmatpush1.msra.mxu0 0.0
    %2040 = vmatprep.subr.mxu0 0.0
    %2041 = vmatpush1.msra.mxu0 0.0
    %2042 = vmatprep.subr.mxu0 0.0
    %2043 = vmatpush1.msra.mxu0 0.0
    %2044 = vmatprep.subr.mxu0 0.0
    %2045 = vmatpush1.msra.mxu0 0.0
    %2046 = vmatprep.subr.mxu0 0.0
    %2047 = vmatpush1.msra.mxu0 0.0
    %2048 = vmatprep.subr.mxu0 0.0
    %2049 = vmatpush1.msra.mxu0 0.0
    %2050 = vmatprep.subr.mxu0 0.0
    %2051 = vmatpush1.msra.mxu0 0.0
    %2052 = vmatprep.subr.mxu0 0.0
    %2053 = vmatpush1.msra.mxu0 0.0
    %2054 = vmatprep.subr.mxu0 0.0
    %2055 = vmatpush1.msra.mxu0 0.0
    %2056 = vmatprep.subr.mxu0 0.0
    %2057 = vmatpush1.msra.mxu0 0.0
    %2058 = vmatprep.subr.mxu0 0.0
    %2059 = vmatpush1.msra.mxu0 0.0
    %2060 = vmatprep.subr.mxu0 0.0
    %2061 = vmatpush1.msra.mxu0 0.0
    %2062 = vmatprep.subr.mxu0 0.0
    %2063 = vmatpush1.msra.mxu0 0.0
    %2064 = vmatprep.subr.mxu0 0.0
    %2065 = vmatpush1.msra.mxu0 0.0
    %2066 = vmatprep.subr.mxu0 0.0
    %2067 = vmatpush1.msra.mxu0 0.0
    %2068 = vmatprep.subr.mxu0 0.0
    %2069 = vmatpush1.msra.mxu0 0.0
    %2070 = vmatprep.subr.mxu0 0.0
    %2071 = vmatpush1.msra.mxu0 0.0
    %2072 = vmatprep.subr.mxu0 0.0
    %2073 = vmatpush1.msra.mxu0 0.0
    %2074 = vmatprep.subr.mxu0 0.0
    %2075 = vmatpush1.msra.mxu0 0.0
    %2076 = vmatprep.subr.mxu0 0.0
    %2077 = vmatpush1.msra.mxu0 0.0
    %2078 = vmatprep.subr.mxu0 0.0
    %2079 = vmatpush1.msra.mxu0 0.0
    %2080 = vmatprep.mubr.f32.mxu0 0.0
    %2081 = vmatmul.mubr.f32.gmra.mrb[0].mxu0 %v1838
    %v2082 = vpop.f32.mrb[0].mxu0
    %v2083 = vadd.f32 0.0, %v2082
    %v2084 = vpop.f32.mrb[0].mxu0
    %2085 = vdwg.mxu0
    %v2086 = vadd.f32 %v2015, %v2083
    %v2087 = vxor.u32 %v2086, 2147483648
    %v2088 = vmul.f32 %v2087, 1.442695
    %v2089 = vpow.pop %v2088
    %v2090 = vadd.f32 %v2089, 1.0
    %v2091 = vrcp.pop %v2090
    %v2092 = vmul.f32 1.0, %v2091
    %v2093 = vtanh.pop %v2086
    %v2094 = vmul.f32 %v2092, %v1828
    %2096 = vrot.lane.b32.xlu0 %v2093, 64
    %v2097 = vpop.permute.xlu0 %2096
    %v2099 = vmul.f32 %v2092, %v2097
    %2101 = vrot.lane.b32.xlu0 %v2099, 32
    %v2102 = vpop.permute.xlu0 %2101
    %v2104 = vadd.f32 %v2094, %v2102
    %v2105 = vtanh.pop %v2104
    %2107 = vrot.lane.b32.xlu0 %v2105, 64
    %v2108 = vpop.permute.xlu0 %2107
    %v2110 = vmul.f32 %v2092, %v2108
    %2112 = vrot.lane.b32.xlu0 %v2110, 32
    %v2113 = vpop.permute.xlu0 %2112
    %v2114 = vsel %vm85, %v2113, 0
    %2116 = vmatprep.subr.mxu0 0.0
    %2117 = vmatpush1.msra.mxu0 %v46
    %2118 = vmatprep.subr.mxu0 0.0
    %2119 = vmatpush1.msra.mxu0 %v47
    %2120 = vmatprep.subr.mxu0 0.0
    %2121 = vmatpush1.msra.mxu0 %v48
    %2122 = vmatprep.subr.mxu0 0.0
    %2123 = vmatpush1.msra.mxu0 %v49
    %2124 = vmatprep.subr.mxu0 0.0
    %2125 = vmatpush1.msra.mxu0 0.0
    %2126 = vmatprep.subr.mxu0 0.0
    %2127 = vmatpush1.msra.mxu0 0.0
    %2128 = vmatprep.subr.mxu0 0.0
    %2129 = vmatpush1.msra.mxu0 0.0
    %2130 = vmatprep.subr.mxu0 0.0
    %2131 = vmatpush1.msra.mxu0 0.0
    %2132 = vmatprep.subr.mxu0 0.0
    %2133 = vmatpush1.msra.mxu0 0.0
    %2134 = vmatprep.subr.mxu0 0.0
    %2135 = vmatpush1.msra.mxu0 0.0
    %2136 = vmatprep.subr.mxu0 0.0
    %2137 = vmatpush1.msra.mxu0 0.0
    %2138 = vmatprep.subr.mxu0 0.0
    %2139 = vmatpush1.msra.mxu0 0.0
    %2140 = vmatprep.subr.mxu0 0.0
    %2141 = vmatpush1.msra.mxu0 0.0
    %2142 = vmatprep.subr.mxu0 0.0
    %2143 = vmatpush1.msra.mxu0 0.0
    %2144 = vmatprep.subr.mxu0 0.0
    %2145 = vmatpush1.msra.mxu0 0.0
    %2146 = vmatprep.subr.mxu0 0.0
    %2147 = vmatpush1.msra.mxu0 0.0
    %2148 = vmatprep.subr.mxu0 0.0
    %2149 = vmatpush1.msra.mxu0 0.0
    %2150 = vmatprep.subr.mxu0 0.0
    %2151 = vmatpush1.msra.mxu0 0.0
    %2152 = vmatprep.subr.mxu0 0.0
    %2153 = vmatpush1.msra.mxu0 0.0
    %2154 = vmatprep.subr.mxu0 0.0
    %2155 = vmatpush1.msra.mxu0 0.0
    %2156 = vmatprep.subr.mxu0 0.0
    %2157 = vmatpush1.msra.mxu0 0.0
    %2158 = vmatprep.subr.mxu0 0.0
    %2159 = vmatpush1.msra.mxu0 0.0
    %2160 = vmatprep.subr.mxu0 0.0
    %2161 = vmatpush1.msra.mxu0 0.0
    %2162 = vmatprep.subr.mxu0 0.0
    %2163 = vmatpush1.msra.mxu0 0.0
    %2164 = vmatprep.subr.mxu0 0.0
    %2165 = vmatpush1.msra.mxu0 0.0
    %2166 = vmatprep.subr.mxu0 0.0
    %2167 = vmatpush1.msra.mxu0 0.0
    %2168 = vmatprep.subr.mxu0 0.0
    %2169 = vmatpush1.msra.mxu0 0.0
    %2170 = vmatprep.subr.mxu0 0.0
    %2171 = vmatpush1.msra.mxu0 0.0
    %2172 = vmatprep.subr.mxu0 0.0
    %2173 = vmatpush1.msra.mxu0 0.0
    %2174 = vmatprep.subr.mxu0 0.0
    %2175 = vmatpush1.msra.mxu0 0.0
    %2176 = vmatprep.subr.mxu0 0.0
    %2177 = vmatpush1.msra.mxu0 0.0
    %2178 = vmatprep.subr.mxu0 0.0
    %2179 = vmatpush1.msra.mxu0 0.0
    %2180 = vmatprep.mubr.f32.mxu0 0.0
    %2181 = vmatmul.mubr.f32.gmra.mrb[0].mxu0 %v2114
    %v2182 = vpop.f32.mrb[0].mxu0
    %v2183 = vadd.f32 0.0, %v2182
    %v2184 = vpop.f32.mrb[0].mxu0
    %2185 = vdwg.mxu0
    %2187 = vrot.lane.b32.xlu0 %v2009, 32
    %v2188 = vpop.permute.xlu0 %2187
    %v2189 = vsel %vm85, %v2188, 0
    %2191 = vmatprep.subr.mxu0 0.0
    %2192 = vmatpush1.msra.mxu0 %v50
    %2193 = vmatprep.subr.mxu0 0.0
    %2194 = vmatpush1.msra.mxu0 %v51
    %2195 = vmatprep.subr.mxu0 0.0
    %2196 = vmatpush1.msra.mxu0 %v52
    %2197 = vmatprep.subr.mxu0 0.0
    %2198 = vmatpush1.msra.mxu0 %v53
    %2199 = vmatprep.subr.mxu0 0.0
    %2200 = vmatpush1.msra.mxu0 0.0
    %2201 = vmatprep.subr.mxu0 0.0
    %2202 = vmatpush1.msra.mxu0 0.0
    %2203 = vmatprep.subr.mxu0 0.0
    %2204 = vmatpush1.msra.mxu0 0.0
    %2205 = vmatprep.subr.mxu0 0.0
    %2206 = vmatpush1.msra.mxu0 0.0
    %2207 = vmatprep.subr.mxu0 0.0
    %2208 = vmatpush1.msra.mxu0 0.0
    %2209 = vmatprep.subr.mxu0 0.0
    %2210 = vmatpush1.msra.mxu0 0.0
    %2211 = vmatprep.subr.mxu0 0.0
    %2212 = vmatpush1.msra.mxu0 0.0
    %2213 = vmatprep.subr.mxu0 0.0
    %2214 = vmatpush1.msra.mxu0 0.0
    %2215 = vmatprep.subr.mxu0 0.0
    %2216 = vmatpush1.msra.mxu0 0.0
    %2217 = vmatprep.subr.mxu0 0.0
    %2218 = vmatpush1.msra.mxu0 0.0
    %2219 = vmatprep.subr.mxu0 0.0
    %2220 = vmatpush1.msra.mxu0 0.0
    %2221 = vmatprep.subr.mxu0 0.0
    %2222 = vmatpush1.msra.mxu0 0.0
    %2223 = vmatprep.subr.mxu0 0.0
    %2224 = vmatpush1.msra.mxu0 0.0
    %2225 = vmatprep.subr.mxu0 0.0
    %2226 = vmatpush1.msra.mxu0 0.0
    %2227 = vmatprep.subr.mxu0 0.0
    %2228 = vmatpush1.msra.mxu0 0.0
    %2229 = vmatprep.subr.mxu0 0.0
    %2230 = vmatpush1.msra.mxu0 0.0
    %2231 = vmatprep.subr.mxu0 0.0
    %2232 = vmatpush1.msra.mxu0 0.0
    %2233 = vmatprep.subr.mxu0 0.0
    %2234 = vmatpush1.msra.mxu0 0.0
    %2235 = vmatprep.subr.mxu0 0.0
    %2236 = vmatpush1.msra.mxu0 0.0
    %2237 = vmatprep.subr.mxu0 0.0
    %2238 = vmatpush1.msra.mxu0 0.0
    %2239 = vmatprep.subr.mxu0 0.0
    %2240 = vmatpush1.msra.mxu0 0.0
    %2241 = vmatprep.subr.mxu0 0.0
    %2242 = vmatpush1.msra.mxu0 0.0
    %2243 = vmatprep.subr.mxu0 0.0
    %2244 = vmatpush1.msra.mxu0 0.0
    %2245 = vmatprep.subr.mxu0 0.0
    %2246 = vmatpush1.msra.mxu0 0.0
    %2247 = vmatprep.subr.mxu0 0.0
    %2248 = vmatpush1.msra.mxu0 0.0
    %2249 = vmatprep.subr.mxu0 0.0
    %2250 = vmatpush1.msra.mxu0 0.0
    %2251 = vmatprep.subr.mxu0 0.0
    %2252 = vmatpush1.msra.mxu0 0.0
    %2253 = vmatprep.subr.mxu0 0.0
    %2254 = vmatpush1.msra.mxu0 0.0
    %2255 = vmatprep.mubr.f32.mxu0 0.0
    %2256 = vmatmul.mubr.f32.gmra.mrb[0].mxu0 %v2189
    %v2257 = vpop.f32.mrb[0].mxu0
    %v2258 = vadd.f32 %v2183, %v2257
    %v2259 = vpop.f32.mrb[0].mxu0
    %2260 = vdwg.mxu0
    %v2261 = vadd.f32 %v2258, %v72
    %v2262 = vxor.u32 %v2261, 2147483648
    %v2263 = vmul.f32 %v2262, 1.442695
    %v2264 = vpow.pop %v2263
    %v2265 = vadd.f32 %v2264, 1.0
    %v2266 = vrcp.pop %v2265
    %v2267 = vmul.f32 1.0, %v2266
    %v2268 = vtanh.pop %v2261
    %v2269 = vmul.f32 %v2267, %v2003
    %2271 = vrot.lane.b32.xlu0 %v2268, 64
    %v2272 = vpop.permute.xlu0 %2271
    %v2274 = vmul.f32 %v2267, %v2272
    %2276 = vrot.lane.b32.xlu0 %v2274, 32
    %v2277 = vpop.permute.xlu0 %2276
    %v2279 = vadd.f32 %v2269, %v2277
    %v2280 = vtanh.pop %v2279
    %2282 = vrot.lane.b32.xlu0 %v2280, 64
    %v2283 = vpop.permute.xlu0 %2282
    %v2285 = vmul.f32 %v2267, %v2283
    %2287 = vrot.lane.b32.xlu0 %v2285, 32
    %v2288 = vpop.permute.xlu0 %2287
    %v2289 = vsel %vm85, %v2288, 0
    %2291 = vmatprep.subr.mxu0 0.0
    %2292 = vmatpush1.msra.mxu0 %v54
    %2293 = vmatprep.subr.mxu0 0.0
    %2294 = vmatpush1.msra.mxu0 %v55
    %2295 = vmatprep.subr.mxu0 0.0
    %2296 = vmatpush1.msra.mxu0 %v56
    %2297 = vmatprep.subr.mxu0 0.0
    %2298 = vmatpush1.msra.mxu0 %v57
    %2299 = vmatprep.subr.mxu0 0.0
    %2300 = vmatpush1.msra.mxu0 0.0
    %2301 = vmatprep.subr.mxu0 0.0
    %2302 = vmatpush1.msra.mxu0 0.0
    %2303 = vmatprep.subr.mxu0 0.0
    %2304 = vmatpush1.msra.mxu0 0.0
    %2305 = vmatprep.subr.mxu0 0.0
    %2306 = vmatpush1.msra.mxu0 0.0
    %2307 = vmatprep.subr.mxu0 0.0
    %2308 = vmatpush1.msra.mxu0 0.0
    %2309 = vmatprep.subr.mxu0 0.0
    %2310 = vmatpush1.msra.mxu0 0.0
    %2311 = vmatprep.subr.mxu0 0.0
    %2312 = vmatpush1.msra.mxu0 0.0
    %2313 = vmatprep.subr.mxu0 0.0
    %2314 = vmatpush1.msra.mxu0 0.0
    %2315 = vmatprep.subr.mxu0 0.0
    %2316 = vmatpush1.msra.mxu0 0.0
    %2317 = vmatprep.subr.mxu0 0.0
    %2318 = vmatpush1.msra.mxu0 0.0
    %2319 = vmatprep.subr.mxu0 0.0
    %2320 = vmatpush1.msra.mxu0 0.0
    %2321 = vmatprep.subr.mxu0 0.0
    %2322 = vmatpush1.msra.mxu0 0.0
    %2323 = vmatprep.subr.mxu0 0.0
    %2324 = vmatpush1.msra.mxu0 0.0
    %2325 = vmatprep.subr.mxu0 0.0
    %2326 = vmatpush1.msra.mxu0 0.0
    %2327 = vmatprep.subr.mxu0 0.0
    %2328 = vmatpush1.msra.mxu0 0.0
    %2329 = vmatprep.subr.mxu0 0.0
    %2330 = vmatpush1.msra.mxu0 0.0
    %2331 = vmatprep.subr.mxu0 0.0
    %2332 = vmatpush1.msra.mxu0 0.0
    %2333 = vmatprep.subr.mxu0 0.0
    %2334 = vmatpush1.msra.mxu0 0.0
    %2335 = vmatprep.subr.mxu0 0.0
    %2336 = vmatpush1.msra.mxu0 0.0
    %2337 = vmatprep.subr.mxu0 0.0
    %2338 = vmatpush1.msra.mxu0 0.0
    %2339 = vmatprep.subr.mxu0 0.0
    %2340 = vmatpush1.msra.mxu0 0.0
    %2341 = vmatprep.subr.mxu0 0.0
    %2342 = vmatpush1.msra.mxu0 0.0
    %2343 = vmatprep.subr.mxu0 0.0
    %2344 = vmatpush1.msra.mxu0 0.0
    %2345 = vmatprep.subr.mxu0 0.0
    %2346 = vmatpush1.msra.mxu0 0.0
    %2347 = vmatprep.subr.mxu0 0.0
    %2348 = vmatpush1.msra.mxu0 0.0
    %2349 = vmatprep.subr.mxu0 0.0
    %2350 = vmatpush1.msra.mxu0 0.0
    %2351 = vmatprep.subr.mxu0 0.0
    %2352 = vmatpush1.msra.mxu0 0.0
    %2353 = vmatprep.subr.mxu0 0.0
    %2354 = vmatpush1.msra.mxu0 0.0
    %2355 = vmatprep.mubr.f32.mxu0 0.0
    %2356 = vmatmul.mubr.f32.gmra.mrb[0].mxu0 %v2289
    %v2357 = vpop.f32.mrb[0].mxu0
    %v2358 = vadd.f32 %v77, %v2357
    %v2359 = vpop.f32.mrb[0].mxu0
    %2360 = vdwg.mxu0
    %vm2361 = vcmask 25600
    %2362 = vst.msk [vmem:[#allocation7] sm:$0x3] %vm2361, %v2358
    // Predicated region
    $region22: #{clf_forward.1} parent=1 // pred_check
      _
    $region23: #{clf_forward.1} parent=1 // pred_check_branch
      %2364 = sbr.rel (0) target = $region25
    $region24: #{clf_forward.1} parent=1 // pred_region
      %s2366 = ssub.s32 32, 32
      %2367 = vsyncadd [#allocation4], %s2366
      %s2369 = sshll.u32 [#allocation7], 4
      %s2370 = int_to_ptr.vmem [resolvable:$true] %s2369
      %2372 = dma.vmem_to_hbm [thread:$0]  %s2370, 32, %s3, [#allocation4]
    $region25: #{clf_forward.1} parent=1 // pred_fallthru
      _
    // Predicated region
    $region26: #{clf_forward.1} parent=1 // pred_check
      _
    $region27: #{clf_forward.1} parent=1 // pred_check_branch
      %2374 = sbr.rel (0) target = $region29
    $region28: #{clf_forward.1} parent=1 // pred_region
      %2375 = dma.done [#allocation4], 32
    $region29: #{clf_forward.1} parent=1 // pred_fallthru
      _
    %2376 = vsyncpa [#allocation3], 1
    %2377 = vsyncpa [#allocation6], 1
    %2378 = vsyncpa [#allocation4], 1

</llo_original>
